<compile_context>
chip_gen: v5e
topology: v5e:2x2
jax: 0.10.0
libtpu: 0.0.40
codegen_flags: <defaults>
</compile_context>

<pallas_src>
import functools

import jax
import jax.numpy as jnp
from jax.experimental import pallas as pl
from jax.experimental.pallas import tpu as pltpu


def _layernorm(x, gamma, beta, eps=1e-5):
    # x: (R, E); gamma/beta: (1, E). Biased variance (torch LayerNorm).
    mean = jnp.mean(x, axis=-1, keepdims=True)
    xc = x - mean
    var = jnp.mean(xc * xc, axis=-1, keepdims=True)
    inv = jax.lax.rsqrt(var + eps)
    return xc * inv * gamma + beta


def _gelu_tanh(x):
    # tanh-form GELU: routes the transcendental to the EUP slot (idle during the
    # MLP matmuls) instead of a long erf polynomial on the VALU.
    c = 0.7978845608028654  # sqrt(2/pi)
    return 0.5 * x * (1.0 + jnp.tanh(c * (x + 0.044715 * x * x * x)))


def encoder_kernel(num_heads, fast_math,
                   x_ref, gamma_ref, beta_ref,
                   wqkv_ref, bqkv_ref, wo_ref, bo_ref,
                   w1_ref, b1_ref, w2_ref, b2_ref,
                   out_ref, o_heads_ref):
    xb = x_ref[...]                               # (Bt, S, E) f32
    Bt, S, E = xb.shape
    H = num_heads
    hd = E // H
    R = Bt * S
    cd = wqkv_ref.dtype                           # MXU operand dtype

    gamma = gamma_ref[...]                        # (1, E) f32
    beta = beta_ref[...]

    # Row-wise ops run on the collapsed (Bt*S, E) slab (lane-dense).
    x2 = xb.reshape(R, E)

    # ---- LayerNorm 1 (f32) ----
    n1 = _layernorm(x2, gamma, beta)

    # ---- Fused Q/K/V projection (1/sqrt(hd) already folded into Wq/bq) ----
    # Single cast of the (R, 3E) slab to the compute dtype.
    qkv = (jnp.dot(n1.astype(cd), wqkv_ref[...],
                   preferred_element_type=jnp.float32)
           + bqkv_ref[...]).astype(cd)            # (R, 3E)

    # ---- Multi-head attention ----
    # Scores/softmax/PV are batched over the whole batch tile per head; the
    # per-head outputs land in a VMEM scratch slab at their lane offset, so the
    # unrolled head loop carries no live f32 accumulator, and the "concat +
    # output projection" becomes a single full-K (R,E)x(E,E) matmul.
    for h in range(H):
        qh = qkv[:, h * hd:(h + 1) * hd].reshape(Bt, S, hd)
        kh = qkv[:, E + h * hd:E + (h + 1) * hd].reshape(Bt, S, hd)
        vh = qkv[:, 2 * E + h * hd:2 * E + (h + 1) * hd].reshape(Bt, S, hd)
        s = jnp.einsum('bqd,bkd->bqk', qh, kh,
                       preferred_element_type=jnp.float32)        # (Bt, S, S)
        m = jnp.max(s, axis=-1, keepdims=True)
        e = jnp.exp(s - m)
        denom = jnp.sum(e, axis=-1, keepdims=True)
        if fast_math:
            p = e * pl.reciprocal(denom, approx=True)
        else:
            p = e / denom
        oh = jnp.einsum('bqk,bkd->bqd', p.astype(cd), vh,
                        preferred_element_type=jnp.float32)       # (Bt, S, hd)
        o_heads_ref[:, h * hd:(h + 1) * hd] = oh.reshape(R, hd).astype(cd)

    attn = jnp.dot(o_heads_ref[...], wo_ref[...],
                   preferred_element_type=jnp.float32) + bo_ref[...]

    # ---- Residual 1 ----
    sum1 = attn + x2

    # ---- LayerNorm 2 (same gamma/beta as LN1, matching the module) ----
    n2 = _layernorm(sum1, gamma, beta)

    # ---- MLP: Linear -> GELU(tanh) -> (dropout = identity) -> Linear ----
    h1 = jnp.dot(n2.astype(cd), w1_ref[...],
                 preferred_element_type=jnp.float32) + b1_ref[...]
    h1 = _gelu_tanh(h1)
    mlp = jnp.dot(h1.astype(cd), w2_ref[...],
                  preferred_element_type=jnp.float32) + b2_ref[...]

    # ---- Residual 2 ----
    out_ref[...] = (mlp + sum1).reshape(Bt, S, E).astype(out_ref.dtype)


def _default_block_b(B, min_steps=4):
    # Largest divisor of B that still gives at least `min_steps` grid steps
    # (pipelined x/out DMA, megacore batch sharding on v7x).
    for bb in range(B, 0, -1):
        if B % bb == 0 and B // bb >= min_steps:
            return bb
    return 1


def _default_vmem_limit_bytes():
    # ~85% of physical VMEM, capped at 110 MiB: ~54 MiB on v7x (64 MiB / TC),
    # ~108 MiB on v5e/v6e (128 MiB). Falls back to 64 MiB if the query fails.
    try:
        cap = int(pltpu.get_tpu_info().vmem_capacity_bytes)
        return max(32 * 1024 * 1024, min(int(cap * 0.85), 110 * 1024 * 1024))
    except Exception:
        return 64 * 1024 * 1024


def transformer_encoder(x, params, num_heads, *,
                        compute_dtype=jnp.bfloat16,
                        block_b=None,
                        vmem_limit_bytes=None,
                        single_buffer_weights=True):
    """x: (B, S, E) float32. params: dict of f32 weights (torch layout, W as [in, out])."""
    B, S, E = x.shape
    assert E % num_heads == 0
    hd = E // num_heads
    if block_b is None:
        block_b = _default_block_b(B)
    assert B % block_b == 0, "block_b must divide B"
    if vmem_limit_bytes is None:
        vmem_limit_bytes = _default_vmem_limit_bytes()

    cd = jnp.dtype(compute_dtype)
    fast_math = cd != jnp.dtype(jnp.float32)
    scale = 1.0 / (hd ** 0.5)

    # Fuse Q/K/V projections into one lane-dense (E, 3E) weight and fold the
    # attention scale into Wq/bq.
    wqkv = jnp.concatenate(
        [params["wq"] * scale, params["wk"], params["wv"]], axis=1).astype(cd)
    bqkv = jnp.concatenate(
        [params["bq"] * scale, params["bk"], params["bv"]], axis=1).astype(jnp.float32)
    w_args = [
        params["gamma"].astype(jnp.float32), params["beta"].astype(jnp.float32),
        wqkv, bqkv,
        params["wo"].astype(cd), params["bo"].astype(jnp.float32),
        params["w1"].astype(cd), params["b1"].astype(jnp.float32),
        params["w2"].astype(cd), params["b2"].astype(jnp.float32),
    ]

    kernel = functools.partial(encoder_kernel, num_heads, fast_math)

    def run(buffer_weights_once):
        if buffer_weights_once:
            # Weight blocks are constant across the grid — single-buffer them.
            w_spec = lambda a: pl.BlockSpec(a.shape, lambda i: (0, 0),
                                            pipeline_mode=pl.Buffered(1))
        else:
            w_spec = lambda a: pl.BlockSpec(a.shape, lambda i: (0, 0))
        in_specs = [pl.BlockSpec((block_b, S, E), lambda i: (i, 0, 0))]
        in_specs += [w_spec(a) for a in w_args]
        out_spec = pl.BlockSpec((block_b, S, E), lambda i: (i, 0, 0))
        return pl.pallas_call(
            kernel,
            out_shape=jax.ShapeDtypeStruct((B, S, E), x.dtype),
            grid_spec=pltpu.PrefetchScalarGridSpec(
                num_scalar_prefetch=0,
                grid=(B // block_b,),
                in_specs=in_specs,
                out_specs=out_spec,
                scratch_shapes=[pltpu.VMEM((block_b * S, E), cd)],
            ),
            compiler_params=pltpu.CompilerParams(
                dimension_semantics=("parallel",),
                vmem_limit_bytes=vmem_limit_bytes,
            ),
        )(x, *w_args)

    if single_buffer_weights:
        try:
            return run(True)
        except Exception:
            pass  # pl.Buffered(1) unsupported on this jax version -> default buffering
    return run(False)


def init_params(key, embed_dim, ll_dim):
    ks = jax.random.split(key, 12)

    def lin(kw, kb, fan_in, fan_out):
        w = jax.random.normal(kw, (fan_in, fan_out), jnp.float32) * (1.0 / jnp.sqrt(fan_in))
        b = jax.random.normal(kb, (1, fan_out), jnp.float32) * 0.1
        return w, b

    wq, bq = lin(ks[0], ks[6], embed_dim, embed_dim)
    wk, bk = lin(ks[1], ks[7], embed_dim, embed_dim)
    wv, bv = lin(ks[2], ks[8], embed_dim, embed_dim)
    wo, bo = lin(ks[3], ks[9], embed_dim, embed_dim)
    w1, b1 = lin(ks[4], ks[10], embed_dim, ll_dim)
    w2, b2 = lin(ks[5], ks[11], ll_dim, embed_dim)
    gamma = jnp.ones((1, embed_dim), jnp.float32)
    beta = jnp.zeros((1, embed_dim), jnp.float32)
    return dict(gamma=gamma, beta=beta,
                wq=wq, bq=bq, wk=wk, bk=bk, wv=wv, bv=bv, wo=wo, bo=bo,
                w1=w1, b1=b1, w2=w2, b2=b2)


def reference_encoder(x, p, num_heads, *, approx_gelu=False):
    """Pure-JAX f32 reference reproducing the PyTorch module."""
    def ln(t):
        mu = jnp.mean(t, -1, keepdims=True)
        var = jnp.mean((t - mu) ** 2, -1, keepdims=True)
        return (t - mu) * jax.lax.rsqrt(var + 1e-5) * p["gamma"] + p["beta"]

    B, S, E = x.shape
    hd = E // num_heads
    n1 = ln(x)
    q = (n1 @ p["wq"] + p["bq"]).reshape(B, S, num_heads, hd).transpose(0, 2, 1, 3)
    k = (n1 @ p["wk"] + p["bk"]).reshape(B, S, num_heads, hd).transpose(0, 2, 1, 3)
    v = (n1 @ p["wv"] + p["bv"]).reshape(B, S, num_heads, hd).transpose(0, 2, 1, 3)
    scores = jnp.einsum("bhqd,bhkd->bhqk", q, k) / jnp.sqrt(jnp.float32(hd))
    probs = jax.nn.softmax(scores, axis=-1)
    ao = jnp.einsum("bhqk,bhkd->bhqd", probs, v).transpose(0, 2, 1, 3).reshape(B, S, E)
    attn = ao @ p["wo"] + p["bo"]
    sum1 = attn + x
    n2 = ln(sum1)
    pre = n2 @ p["w1"] + p["b1"]
    h1 = _gelu_tanh(pre) if approx_gelu else jax.nn.gelu(pre, approximate=False)
    mlp = h1 @ p["w2"] + p["b2"]
    return mlp + sum1


if __name__ == "__main__":
    key = jax.random.PRNGKey(0)
    kx, kp, kx2, kp2 = jax.random.split(key, 4)

    # ---- Small shape consistent with the module ----
    B, S, E = 4, 8, 32
    num_heads, ll_dim = 4, 64
    x = jax.random.normal(kx, (B, S, E), jnp.float32)
    params = init_params(kp, E, ll_dim)

    with jax.default_matmul_precision("highest"):
        ref_tanh = reference_encoder(x, params, num_heads, approx_gelu=True)
        ref_exact = reference_encoder(x, params, num_heads, approx_gelu=False)

    # 1) f32 compute path (exact softmax division). Tolerance covers TPU matmul
    #    precision differences between Pallas/Mosaic and XLA.
    out_f32 = jax.block_until_ready(
        transformer_encoder(x, params, num_heads, compute_dtype=jnp.float32))
    assert out_f32.shape == (B, S, E)
    assert jnp.allclose(out_f32, ref_tanh, atol=3e-2, rtol=3e-2), \
        float(jnp.max(jnp.abs(out_f32 - ref_tanh)))

    # 2) bf16 MXU path (f32 accumulation, approx reciprocal, tanh GELU) vs the
    #    exact-erf f32 reference: loose tolerance.
    out_bf16 = jax.block_until_ready(
        transformer_encoder(x, params, num_heads, compute_dtype=jnp.bfloat16))
    assert jnp.allclose(out_bf16, ref_exact, atol=2e-1, rtol=2e-1), \
        float(jnp.max(jnp.abs(out_bf16 - ref_exact)))

    # ---- Lane-aligned, production-like shape (E multiple of 128) ----
    B2, S2, E2 = 8, 128, 256
    heads2, ll2 = 4, 512
    x2 = jax.random.normal(kx2, (B2, S2, E2), jnp.float32)
    params2 = init_params(kp2, E2, ll2)
    with jax.default_matmul_precision("highest"):
        ref2 = reference_encoder(x2, params2, heads2, approx_gelu=False)
    out2 = jax.block_until_ready(
        transformer_encoder(x2, params2, heads2, compute_dtype=jnp.bfloat16))
    assert out2.shape == (B2, S2, E2)
    assert jnp.allclose(out2, ref2, atol=2e-1, rtol=2e-1), \
        float(jnp.max(jnp.abs(out2 - ref2)))

    print("KERNEL_OK")
</pallas_src>

<mosaic_0001>
module attributes {stable_mosaic.version = 11 : i64} {
  func.func @encoder_kernel(%arg0: i32, %arg1: memref<1x8x32xf32, #tpu.memory_space<vmem>>, %arg2: memref<1x32xf32, #tpu.memory_space<vmem>>, %arg3: memref<1x32xf32, #tpu.memory_space<vmem>>, %arg4: memref<32x96xf32, #tpu.memory_space<vmem>>, %arg5: memref<1x96xf32, #tpu.memory_space<vmem>>, %arg6: memref<32x32xf32, #tpu.memory_space<vmem>>, %arg7: memref<1x32xf32, #tpu.memory_space<vmem>>, %arg8: memref<32x64xf32, #tpu.memory_space<vmem>>, %arg9: memref<1x64xf32, #tpu.memory_space<vmem>>, %arg10: memref<64x32xf32, #tpu.memory_space<vmem>>, %arg11: memref<1x32xf32, #tpu.memory_space<vmem>>, %arg12: memref<1x8x32xf32, #tpu.memory_space<vmem>>, %arg13: memref<8x32xf32, #tpu.memory_space<vmem>>) attributes {dimension_semantics = [#tpu.dimension_semantics<parallel>], iteration_bounds = array<i64: 4>, scalar_prefetch = 0 : i64, scratch_operands = 1 : i64, tpu.core_type = #tpu.core_type<tc>, window_params = [{transform_indices = @transform_0, window_bounds = array<i64: 1, 8, 32>}, {pipeline_mode = #tpu.pipeline_mode<synchronous>, transform_indices = @transform_1, window_bounds = array<i64: 1, 32>}, {pipeline_mode = #tpu.pipeline_mode<synchronous>, transform_indices = @transform_2, window_bounds = array<i64: 1, 32>}, {pipeline_mode = #tpu.pipeline_mode<synchronous>, transform_indices = @transform_3, window_bounds = array<i64: 32, 96>}, {pipeline_mode = #tpu.pipeline_mode<synchronous>, transform_indices = @transform_4, window_bounds = array<i64: 1, 96>}, {pipeline_mode = #tpu.pipeline_mode<synchronous>, transform_indices = @transform_5, window_bounds = array<i64: 32, 32>}, {pipeline_mode = #tpu.pipeline_mode<synchronous>, transform_indices = @transform_6, window_bounds = array<i64: 1, 32>}, {pipeline_mode = #tpu.pipeline_mode<synchronous>, transform_indices = @transform_7, window_bounds = array<i64: 32, 64>}, {pipeline_mode = #tpu.pipeline_mode<synchronous>, transform_indices = @transform_8, window_bounds = array<i64: 1, 64>}, {pipeline_mode = #tpu.pipeline_mode<synchronous>, transform_indices = @transform_9, window_bounds = array<i64: 64, 32>}, {pipeline_mode = #tpu.pipeline_mode<synchronous>, transform_indices = @transform_10, window_bounds = array<i64: 1, 32>}, {transform_indices = @transform_11, window_bounds = array<i64: 1, 8, 32>}]} {
    %c0 = arith.constant 0 : index
    %c0_0 = arith.constant 0 : index
    %c0_1 = arith.constant 0 : index
    %0 = vector.load %arg1[%c0, %c0_0, %c0_1] : memref<1x8x32xf32, #tpu.memory_space<vmem>>, vector<1x8x32xf32>
    %c0_2 = arith.constant 0 : index
    %c0_3 = arith.constant 0 : index
    %1 = vector.load %arg2[%c0_2, %c0_3] : memref<1x32xf32, #tpu.memory_space<vmem>>, vector<1x32xf32>
    %c0_4 = arith.constant 0 : index
    %c0_5 = arith.constant 0 : index
    %2 = vector.load %arg3[%c0_4, %c0_5] : memref<1x32xf32, #tpu.memory_space<vmem>>, vector<1x32xf32>
    %3 = vector.shape_cast %0 : vector<1x8x32xf32> to vector<8x32xf32>
    %cst = arith.constant dense<0.000000e+00> : vector<8xf32>
    %4 = vector.multi_reduction <add>, %3, %cst [1] : vector<8x32xf32> to vector<8xf32>
    %5 = vector.shape_cast %4 : vector<8xf32> to vector<8x1xf32>
    %cst_6 = arith.constant 3.200000e+01 : f32
    %6 = vector.broadcast %cst_6 : f32 to vector<8x1xf32>
    %7 = arith.divf %5, %6 : vector<8x1xf32>
    %8 = vector.broadcast %7 : vector<8x1xf32> to vector<8x32xf32>
    %9 = arith.subf %3, %8 : vector<8x32xf32>
    %10 = arith.mulf %9, %9 : vector<8x32xf32>
    %cst_7 = arith.constant dense<0.000000e+00> : vector<8xf32>
    %11 = vector.multi_reduction <add>, %10, %cst_7 [1] : vector<8x32xf32> to vector<8xf32>
    %12 = vector.shape_cast %11 : vector<8xf32> to vector<8x1xf32>
    %cst_8 = arith.constant 3.200000e+01 : f32
    %13 = vector.broadcast %cst_8 : f32 to vector<8x1xf32>
    %14 = arith.divf %12, %13 : vector<8x1xf32>
    %cst_9 = arith.constant 9.99999974E-6 : f32
    %15 = vector.broadcast %cst_9 : f32 to vector<8x1xf32>
    %16 = arith.addf %14, %15 : vector<8x1xf32>
    %17 = math.rsqrt %16 : vector<8x1xf32>
    %18 = vector.broadcast %17 : vector<8x1xf32> to vector<8x32xf32>
    %19 = arith.mulf %9, %18 : vector<8x32xf32>
    %20 = vector.broadcast %1 : vector<1x32xf32> to vector<8x32xf32>
    %21 = arith.mulf %19, %20 : vector<8x32xf32>
    %22 = vector.broadcast %2 : vector<1x32xf32> to vector<8x32xf32>
    %23 = arith.addf %21, %22 : vector<8x32xf32>
    %c0_10 = arith.constant 0 : index
    %c0_11 = arith.constant 0 : index
    %24 = vector.load %arg4[%c0_10, %c0_11] : memref<32x96xf32, #tpu.memory_space<vmem>>, vector<32x96xf32>
    %cst_12 = arith.constant dense<0.000000e+00> : vector<8x96xf32>
    %25 = tpu.matmul %23, %24, %cst_12 {dimension_numbers = #tpu.dot_dimension_numbers<[1], [0], [0], [1], [0, 0, 1, 1], [], []>} : vector<8x32xf32>, vector<32x96xf32>, vector<8x96xf32> -> vector<8x96xf32>
    %c0_13 = arith.constant 0 : index
    %c0_14 = arith.constant 0 : index
    %26 = vector.load %arg5[%c0_13, %c0_14] : memref<1x96xf32, #tpu.memory_space<vmem>>, vector<1x96xf32>
    %27 = vector.broadcast %26 : vector<1x96xf32> to vector<8x96xf32>
    %28 = arith.addf %25, %27 : vector<8x96xf32>
    %29 = vector.extract_strided_slice %28 {offsets = [0, 0], sizes = [8, 8], strides = [1, 1]} : vector<8x96xf32> to vector<8x8xf32>
    %30 = vector.shape_cast %29 : vector<8x8xf32> to vector<1x8x8xf32>
    %31 = vector.extract_strided_slice %28 {offsets = [0, 32], sizes = [8, 8], strides = [1, 1]} : vector<8x96xf32> to vector<8x8xf32>
    %32 = vector.shape_cast %31 : vector<8x8xf32> to vector<1x8x8xf32>
    %33 = vector.extract_strided_slice %28 {offsets = [0, 64], sizes = [8, 8], strides = [1, 1]} : vector<8x96xf32> to vector<8x8xf32>
    %34 = vector.shape_cast %33 : vector<8x8xf32> to vector<1x8x8xf32>
    "tpu.trace_start"() <{level = 10 : i32, message = "bqd,bkd->bqk"}> : () -> ()
    %cst_15 = arith.constant dense<0.000000e+00> : vector<1x8x8xf32>
    %35 = tpu.matmul %30, %32, %cst_15 {dimension_numbers = #tpu.dot_dimension_numbers<[2], [2], [1], [1], [0, 0, 0, 1, 1, 1], [0], [0]>} : vector<1x8x8xf32>, vector<1x8x8xf32>, vector<1x8x8xf32> -> vector<1x8x8xf32>
    "tpu.trace_stop"() : () -> ()
    %cst_16 = arith.constant dense<0xFF800000> : vector<1x8xf32>
    %36 = vector.multi_reduction <maximumf>, %35, %cst_16 [2] : vector<1x8x8xf32> to vector<1x8xf32>
    %37 = vector.shape_cast %36 : vector<1x8xf32> to vector<1x8x1xf32>
    %38 = vector.broadcast %37 : vector<1x8x1xf32> to vector<1x8x8xf32>
    %39 = arith.subf %35, %38 : vector<1x8x8xf32>
    %40 = math.exp %39 : vector<1x8x8xf32>
    %cst_17 = arith.constant dense<0.000000e+00> : vector<1x8xf32>
    %41 = vector.multi_reduction <add>, %40, %cst_17 [2] : vector<1x8x8xf32> to vector<1x8xf32>
    %42 = vector.shape_cast %41 : vector<1x8xf32> to vector<1x8x1xf32>
    %43 = vector.broadcast %42 : vector<1x8x1xf32> to vector<1x8x8xf32>
    %44 = arith.divf %40, %43 : vector<1x8x8xf32>
    "tpu.trace_start"() <{level = 10 : i32, message = "bqk,bkd->bqd"}> : () -> ()
    %cst_18 = arith.constant dense<0.000000e+00> : vector<1x8x8xf32>
    %45 = tpu.matmul %44, %34, %cst_18 {dimension_numbers = #tpu.dot_dimension_numbers<[2], [1], [1], [2], [0, 0, 0, 1, 1, 2], [0], [0]>} : vector<1x8x8xf32>, vector<1x8x8xf32>, vector<1x8x8xf32> -> vector<1x8x8xf32>
    "tpu.trace_stop"() : () -> ()
    %46 = vector.shape_cast %45 : vector<1x8x8xf32> to vector<8x8xf32>
    %c0_19 = arith.constant 0 : index
    %c0_20 = arith.constant 0 : index
    %47 = vector.load %arg13[%c0_19, %c0_20] : memref<8x32xf32, #tpu.memory_space<vmem>>, vector<8x8xf32>
    tpu.vector_store %arg13[%c0_19, %c0_20], %46 {strides = array<i32>} : memref<8x32xf32, #tpu.memory_space<vmem>>, vector<8x8xf32>,
    %48 = vector.extract_strided_slice %28 {offsets = [0, 8], sizes = [8, 8], strides = [1, 1]} : vector<8x96xf32> to vector<8x8xf32>
    %49 = vector.shape_cast %48 : vector<8x8xf32> to vector<1x8x8xf32>
    %50 = vector.extract_strided_slice %28 {offsets = [0, 40], sizes = [8, 8], strides = [1, 1]} : vector<8x96xf32> to vector<8x8xf32>
    %51 = vector.shape_cast %50 : vector<8x8xf32> to vector<1x8x8xf32>
    %52 = vector.extract_strided_slice %28 {offsets = [0, 72], sizes = [8, 8], strides = [1, 1]} : vector<8x96xf32> to vector<8x8xf32>
    %53 = vector.shape_cast %52 : vector<8x8xf32> to vector<1x8x8xf32>
    "tpu.trace_start"() <{level = 10 : i32, message = "bqd,bkd->bqk"}> : () -> ()
    %cst_21 = arith.constant dense<0.000000e+00> : vector<1x8x8xf32>
    %54 = tpu.matmul %49, %51, %cst_21 {dimension_numbers = #tpu.dot_dimension_numbers<[2], [2], [1], [1], [0, 0, 0, 1, 1, 1], [0], [0]>} : vector<1x8x8xf32>, vector<1x8x8xf32>, vector<1x8x8xf32> -> vector<1x8x8xf32>
    "tpu.trace_stop"() : () -> ()
    %cst_22 = arith.constant dense<0xFF800000> : vector<1x8xf32>
    %55 = vector.multi_reduction <maximumf>, %54, %cst_22 [2] : vector<1x8x8xf32> to vector<1x8xf32>
    %56 = vector.shape_cast %55 : vector<1x8xf32> to vector<1x8x1xf32>
    %57 = vector.broadcast %56 : vector<1x8x1xf32> to vector<1x8x8xf32>
    %58 = arith.subf %54, %57 : vector<1x8x8xf32>
    %59 = math.exp %58 : vector<1x8x8xf32>
    %cst_23 = arith.constant dense<0.000000e+00> : vector<1x8xf32>
    %60 = vector.multi_reduction <add>, %59, %cst_23 [2] : vector<1x8x8xf32> to vector<1x8xf32>
    %61 = vector.shape_cast %60 : vector<1x8xf32> to vector<1x8x1xf32>
    %62 = vector.broadcast %61 : vector<1x8x1xf32> to vector<1x8x8xf32>
    %63 = arith.divf %59, %62 : vector<1x8x8xf32>
    "tpu.trace_start"() <{level = 10 : i32, message = "bqk,bkd->bqd"}> : () -> ()
    %cst_24 = arith.constant dense<0.000000e+00> : vector<1x8x8xf32>
    %64 = tpu.matmul %63, %53, %cst_24 {dimension_numbers = #tpu.dot_dimension_numbers<[2], [1], [1], [2], [0, 0, 0, 1, 1, 2], [0], [0]>} : vector<1x8x8xf32>, vector<1x8x8xf32>, vector<1x8x8xf32> -> vector<1x8x8xf32>
    "tpu.trace_stop"() : () -> ()
    %65 = vector.shape_cast %64 : vector<1x8x8xf32> to vector<8x8xf32>
    %c0_25 = arith.constant 0 : index
    %c8 = arith.constant 8 : index
    %66 = vector.load %arg13[%c0_25, %c8] : memref<8x32xf32, #tpu.memory_space<vmem>>, vector<8x8xf32>
    tpu.vector_store %arg13[%c0_25, %c8], %65 {strides = array<i32>} : memref<8x32xf32, #tpu.memory_space<vmem>>, vector<8x8xf32>,
    %67 = vector.extract_strided_slice %28 {offsets = [0, 16], sizes = [8, 8], strides = [1, 1]} : vector<8x96xf32> to vector<8x8xf32>
    %68 = vector.shape_cast %67 : vector<8x8xf32> to vector<1x8x8xf32>
    %69 = vector.extract_strided_slice %28 {offsets = [0, 48], sizes = [8, 8], strides = [1, 1]} : vector<8x96xf32> to vector<8x8xf32>
    %70 = vector.shape_cast %69 : vector<8x8xf32> to vector<1x8x8xf32>
    %71 = vector.extract_strided_slice %28 {offsets = [0, 80], sizes = [8, 8], strides = [1, 1]} : vector<8x96xf32> to vector<8x8xf32>
    %72 = vector.shape_cast %71 : vector<8x8xf32> to vector<1x8x8xf32>
    "tpu.trace_start"() <{level = 10 : i32, message = "bqd,bkd->bqk"}> : () -> ()
    %cst_26 = arith.constant dense<0.000000e+00> : vector<1x8x8xf32>
    %73 = tpu.matmul %68, %70, %cst_26 {dimension_numbers = #tpu.dot_dimension_numbers<[2], [2], [1], [1], [0, 0, 0, 1, 1, 1], [0], [0]>} : vector<1x8x8xf32>, vector<1x8x8xf32>, vector<1x8x8xf32> -> vector<1x8x8xf32>
    "tpu.trace_stop"() : () -> ()
    %cst_27 = arith.constant dense<0xFF800000> : vector<1x8xf32>
    %74 = vector.multi_reduction <maximumf>, %73, %cst_27 [2] : vector<1x8x8xf32> to vector<1x8xf32>
    %75 = vector.shape_cast %74 : vector<1x8xf32> to vector<1x8x1xf32>
    %76 = vector.broadcast %75 : vector<1x8x1xf32> to vector<1x8x8xf32>
    %77 = arith.subf %73, %76 : vector<1x8x8xf32>
    %78 = math.exp %77 : vector<1x8x8xf32>
    %cst_28 = arith.constant dense<0.000000e+00> : vector<1x8xf32>
    %79 = vector.multi_reduction <add>, %78, %cst_28 [2] : vector<1x8x8xf32> to vector<1x8xf32>
    %80 = vector.shape_cast %79 : vector<1x8xf32> to vector<1x8x1xf32>
    %81 = vector.broadcast %80 : vector<1x8x1xf32> to vector<1x8x8xf32>
    %82 = arith.divf %78, %81 : vector<1x8x8xf32>
    "tpu.trace_start"() <{level = 10 : i32, message = "bqk,bkd->bqd"}> : () -> ()
    %cst_29 = arith.constant dense<0.000000e+00> : vector<1x8x8xf32>
    %83 = tpu.matmul %82, %72, %cst_29 {dimension_numbers = #tpu.dot_dimension_numbers<[2], [1], [1], [2], [0, 0, 0, 1, 1, 2], [0], [0]>} : vector<1x8x8xf32>, vector<1x8x8xf32>, vector<1x8x8xf32> -> vector<1x8x8xf32>
    "tpu.trace_stop"() : () -> ()
    %84 = vector.shape_cast %83 : vector<1x8x8xf32> to vector<8x8xf32>
    %c0_30 = arith.constant 0 : index
    %c16 = arith.constant 16 : index
    %85 = vector.load %arg13[%c0_30, %c16] : memref<8x32xf32, #tpu.memory_space<vmem>>, vector<8x8xf32>
    tpu.vector_store %arg13[%c0_30, %c16], %84 {strides = array<i32>} : memref<8x32xf32, #tpu.memory_space<vmem>>, vector<8x8xf32>,
    %86 = vector.extract_strided_slice %28 {offsets = [0, 24], sizes = [8, 8], strides = [1, 1]} : vector<8x96xf32> to vector<8x8xf32>
    %87 = vector.shape_cast %86 : vector<8x8xf32> to vector<1x8x8xf32>
    %88 = vector.extract_strided_slice %28 {offsets = [0, 56], sizes = [8, 8], strides = [1, 1]} : vector<8x96xf32> to vector<8x8xf32>
    %89 = vector.shape_cast %88 : vector<8x8xf32> to vector<1x8x8xf32>
    %90 = vector.extract_strided_slice %28 {offsets = [0, 88], sizes = [8, 8], strides = [1, 1]} : vector<8x96xf32> to vector<8x8xf32>
    %91 = vector.shape_cast %90 : vector<8x8xf32> to vector<1x8x8xf32>
    "tpu.trace_start"() <{level = 10 : i32, message = "bqd,bkd->bqk"}> : () -> ()
    %cst_31 = arith.constant dense<0.000000e+00> : vector<1x8x8xf32>
    %92 = tpu.matmul %87, %89, %cst_31 {dimension_numbers = #tpu.dot_dimension_numbers<[2], [2], [1], [1], [0, 0, 0, 1, 1, 1], [0], [0]>} : vector<1x8x8xf32>, vector<1x8x8xf32>, vector<1x8x8xf32> -> vector<1x8x8xf32>
    "tpu.trace_stop"() : () -> ()
    %cst_32 = arith.constant dense<0xFF800000> : vector<1x8xf32>
    %93 = vector.multi_reduction <maximumf>, %92, %cst_32 [2] : vector<1x8x8xf32> to vector<1x8xf32>
    %94 = vector.shape_cast %93 : vector<1x8xf32> to vector<1x8x1xf32>
    %95 = vector.broadcast %94 : vector<1x8x1xf32> to vector<1x8x8xf32>
    %96 = arith.subf %92, %95 : vector<1x8x8xf32>
    %97 = math.exp %96 : vector<1x8x8xf32>
    %cst_33 = arith.constant dense<0.000000e+00> : vector<1x8xf32>
    %98 = vector.multi_reduction <add>, %97, %cst_33 [2] : vector<1x8x8xf32> to vector<1x8xf32>
    %99 = vector.shape_cast %98 : vector<1x8xf32> to vector<1x8x1xf32>
    %100 = vector.broadcast %99 : vector<1x8x1xf32> to vector<1x8x8xf32>
    %101 = arith.divf %97, %100 : vector<1x8x8xf32>
    "tpu.trace_start"() <{level = 10 : i32, message = "bqk,bkd->bqd"}> : () -> ()
    %cst_34 = arith.constant dense<0.000000e+00> : vector<1x8x8xf32>
    %102 = tpu.matmul %101, %91, %cst_34 {dimension_numbers = #tpu.dot_dimension_numbers<[2], [1], [1], [2], [0, 0, 0, 1, 1, 2], [0], [0]>} : vector<1x8x8xf32>, vector<1x8x8xf32>, vector<1x8x8xf32> -> vector<1x8x8xf32>
    "tpu.trace_stop"() : () -> ()
    %103 = vector.shape_cast %102 : vector<1x8x8xf32> to vector<8x8xf32>
    %c0_35 = arith.constant 0 : index
    %c24 = arith.constant 24 : index
    %104 = vector.load %arg13[%c0_35, %c24] : memref<8x32xf32, #tpu.memory_space<vmem>>, vector<8x8xf32>
    tpu.vector_store %arg13[%c0_35, %c24], %103 {strides = array<i32>} : memref<8x32xf32, #tpu.memory_space<vmem>>, vector<8x8xf32>,
    %c0_36 = arith.constant 0 : index
    %c0_37 = arith.constant 0 : index
    %105 = vector.load %arg13[%c0_36, %c0_37] : memref<8x32xf32, #tpu.memory_space<vmem>>, vector<8x32xf32>
    %c0_38 = arith.constant 0 : index
    %c0_39 = arith.constant 0 : index
    %106 = vector.load %arg6[%c0_38, %c0_39] : memref<32x32xf32, #tpu.memory_space<vmem>>, vector<32x32xf32>
    %cst_40 = arith.constant dense<0.000000e+00> : vector<8x32xf32>
    %107 = tpu.matmul %105, %106, %cst_40 {dimension_numbers = #tpu.dot_dimension_numbers<[1], [0], [0], [1], [0, 0, 1, 1], [], []>} : vector<8x32xf32>, vector<32x32xf32>, vector<8x32xf32> -> vector<8x32xf32>
    %c0_41 = arith.constant 0 : index
    %c0_42 = arith.constant 0 : index
    %108 = vector.load %arg7[%c0_41, %c0_42] : memref<1x32xf32, #tpu.memory_space<vmem>>, vector<1x32xf32>
    %109 = vector.broadcast %108 : vector<1x32xf32> to vector<8x32xf32>
    %110 = arith.addf %107, %109 : vector<8x32xf32>
    %111 = arith.addf %110, %3 : vector<8x32xf32>
    %cst_43 = arith.constant dense<0.000000e+00> : vector<8xf32>
    %112 = vector.multi_reduction <add>, %111, %cst_43 [1] : vector<8x32xf32> to vector<8xf32>
    %113 = vector.shape_cast %112 : vector<8xf32> to vector<8x1xf32>
    %cst_44 = arith.constant 3.200000e+01 : f32
    %114 = vector.broadcast %cst_44 : f32 to vector<8x1xf32>
    %115 = arith.divf %113, %114 : vector<8x1xf32>
    %116 = vector.broadcast %115 : vector<8x1xf32> to vector<8x32xf32>
    %117 = arith.subf %111, %116 : vector<8x32xf32>
    %118 = arith.mulf %117, %117 : vector<8x32xf32>
    %cst_45 = arith.constant dense<0.000000e+00> : vector<8xf32>
    %119 = vector.multi_reduction <add>, %118, %cst_45 [1] : vector<8x32xf32> to vector<8xf32>
    %120 = vector.shape_cast %119 : vector<8xf32> to vector<8x1xf32>
    %cst_46 = arith.constant 3.200000e+01 : f32
    %121 = vector.broadcast %cst_46 : f32 to vector<8x1xf32>
    %122 = arith.divf %120, %121 : vector<8x1xf32>
    %cst_47 = arith.constant 9.99999974E-6 : f32
    %123 = vector.broadcast %cst_47 : f32 to vector<8x1xf32>
    %124 = arith.addf %122, %123 : vector<8x1xf32>
    %125 = math.rsqrt %124 : vector<8x1xf32>
    %126 = vector.broadcast %125 : vector<8x1xf32> to vector<8x32xf32>
    %127 = arith.mulf %117, %126 : vector<8x32xf32>
    %128 = vector.broadcast %1 : vector<1x32xf32> to vector<8x32xf32>
    %129 = arith.mulf %127, %128 : vector<8x32xf32>
    %130 = vector.broadcast %2 : vector<1x32xf32> to vector<8x32xf32>
    %131 = arith.addf %129, %130 : vector<8x32xf32>
    %c0_48 = arith.constant 0 : index
    %c0_49 = arith.constant 0 : index
    %132 = vector.load %arg8[%c0_48, %c0_49] : memref<32x64xf32, #tpu.memory_space<vmem>>, vector<32x64xf32>
    %cst_50 = arith.constant dense<0.000000e+00> : vector<8x64xf32>
    %133 = tpu.matmul %131, %132, %cst_50 {dimension_numbers = #tpu.dot_dimension_numbers<[1], [0], [0], [1], [0, 0, 1, 1], [], []>} : vector<8x32xf32>, vector<32x64xf32>, vector<8x64xf32> -> vector<8x64xf32>
    %c0_51 = arith.constant 0 : index
    %c0_52 = arith.constant 0 : index
    %134 = vector.load %arg9[%c0_51, %c0_52] : memref<1x64xf32, #tpu.memory_space<vmem>>, vector<1x64xf32>
    %135 = vector.broadcast %134 : vector<1x64xf32> to vector<8x64xf32>
    %136 = arith.addf %133, %135 : vector<8x64xf32>
    %cst_53 = arith.constant 5.000000e-01 : f32
    %137 = vector.broadcast %cst_53 : f32 to vector<8x64xf32>
    %138 = arith.mulf %137, %136 : vector<8x64xf32>
    %cst_54 = arith.constant 4.471500e-02 : f32
    %139 = vector.broadcast %cst_54 : f32 to vector<8x64xf32>
    %140 = arith.mulf %139, %136 : vector<8x64xf32>
    %141 = arith.mulf %140, %136 : vector<8x64xf32>
    %142 = arith.mulf %141, %136 : vector<8x64xf32>
    %143 = arith.addf %136, %142 : vector<8x64xf32>
    %cst_55 = arith.constant 0.797884583 : f32
    %144 = vector.broadcast %cst_55 : f32 to vector<8x64xf32>
    %145 = arith.mulf %144, %143 : vector<8x64xf32>
    %146 = math.tanh %145 : vector<8x64xf32>
    %cst_56 = arith.constant 1.000000e+00 : f32
    %147 = vector.broadcast %cst_56 : f32 to vector<8x64xf32>
    %148 = arith.addf %147, %146 : vector<8x64xf32>
    %149 = arith.mulf %138, %148 : vector<8x64xf32>
    %c0_57 = arith.constant 0 : index
    %c0_58 = arith.constant 0 : index
    %150 = vector.load %arg10[%c0_57, %c0_58] : memref<64x32xf32, #tpu.memory_space<vmem>>, vector<64x32xf32>
    %cst_59 = arith.constant dense<0.000000e+00> : vector<8x32xf32>
    %151 = tpu.matmul %149, %150, %cst_59 {dimension_numbers = #tpu.dot_dimension_numbers<[1], [0], [0], [1], [0, 0, 1, 1], [], []>} : vector<8x64xf32>, vector<64x32xf32>, vector<8x32xf32> -> vector<8x32xf32>
    %c0_60 = arith.constant 0 : index
    %c0_61 = arith.constant 0 : index
    %152 = vector.load %arg11[%c0_60, %c0_61] : memref<1x32xf32, #tpu.memory_space<vmem>>, vector<1x32xf32>
    %153 = vector.broadcast %152 : vector<1x32xf32> to vector<8x32xf32>
    %154 = arith.addf %151, %153 : vector<8x32xf32>
    %155 = arith.addf %154, %111 : vector<8x32xf32>
    %156 = vector.shape_cast %155 : vector<8x32xf32> to vector<1x8x32xf32>
    %c0_62 = arith.constant 0 : index
    %c0_63 = arith.constant 0 : index
    %c0_64 = arith.constant 0 : index
    %157 = vector.load %arg12[%c0_62, %c0_63, %c0_64] : memref<1x8x32xf32, #tpu.memory_space<vmem>>, vector<1x8x32xf32>
    tpu.vector_store %arg12[%c0_62, %c0_63, %c0_64], %156 {strides = array<i32>} : memref<1x8x32xf32, #tpu.memory_space<vmem>>, vector<1x8x32xf32>,
    return
  }
  func.func @transform_0(%arg0: i32) -> (i32, i32, i32) {
    %c0_i32 = arith.constant 0 : i32
    %c0_i32_0 = arith.constant 0 : i32
    %c0_i32_1 = arith.constant 0 : i32
    return %arg0, %c0_i32, %c0_i32_0 : i32, i32, i32
  }
  func.func @transform_1(%arg0: i32) -> (i32, i32) {
    %c0_i32 = arith.constant 0 : i32
    %c0_i32_0 = arith.constant 0 : i32
    %c0_i32_1 = arith.constant 0 : i32
    return %c0_i32, %c0_i32_0 : i32, i32
  }
  func.func @transform_2(%arg0: i32) -> (i32, i32) {
    %c0_i32 = arith.constant 0 : i32
    %c0_i32_0 = arith.constant 0 : i32
    %c0_i32_1 = arith.constant 0 : i32
    return %c0_i32, %c0_i32_0 : i32, i32
  }
  func.func @transform_3(%arg0: i32) -> (i32, i32) {
    %c0_i32 = arith.constant 0 : i32
    %c0_i32_0 = arith.constant 0 : i32
    %c0_i32_1 = arith.constant 0 : i32
    return %c0_i32, %c0_i32_0 : i32, i32
  }
  func.func @transform_4(%arg0: i32) -> (i32, i32) {
    %c0_i32 = arith.constant 0 : i32
    %c0_i32_0 = arith.constant 0 : i32
    %c0_i32_1 = arith.constant 0 : i32
    return %c0_i32, %c0_i32_0 : i32, i32
  }
  func.func @transform_5(%arg0: i32) -> (i32, i32) {
    %c0_i32 = arith.constant 0 : i32
    %c0_i32_0 = arith.constant 0 : i32
    %c0_i32_1 = arith.constant 0 : i32
    return %c0_i32, %c0_i32_0 : i32, i32
  }
  func.func @transform_6(%arg0: i32) -> (i32, i32) {
    %c0_i32 = arith.constant 0 : i32
    %c0_i32_0 = arith.constant 0 : i32
    %c0_i32_1 = arith.constant 0 : i32
    return %c0_i32, %c0_i32_0 : i32, i32
  }
  func.func @transform_7(%arg0: i32) -> (i32, i32) {
    %c0_i32 = arith.constant 0 : i32
    %c0_i32_0 = arith.constant 0 : i32
    %c0_i32_1 = arith.constant 0 : i32
    return %c0_i32, %c0_i32_0 : i32, i32
  }
  func.func @transform_8(%arg0: i32) -> (i32, i32) {
    %c0_i32 = arith.constant 0 : i32
    %c0_i32_0 = arith.constant 0 : i32
    %c0_i32_1 = arith.constant 0 : i32
    return %c0_i32, %c0_i32_0 : i32, i32
  }
  func.func @transform_9(%arg0: i32) -> (i32, i32) {
    %c0_i32 = arith.constant 0 : i32
    %c0_i32_0 = arith.constant 0 : i32
    %c0_i32_1 = arith.constant 0 : i32
    return %c0_i32, %c0_i32_0 : i32, i32
  }
  func.func @transform_10(%arg0: i32) -> (i32, i32) {
    %c0_i32 = arith.constant 0 : i32
    %c0_i32_0 = arith.constant 0 : i32
    %c0_i32_1 = arith.constant 0 : i32
    return %c0_i32, %c0_i32_0 : i32, i32
  }
  func.func @transform_11(%arg0: i32) -> (i32, i32, i32) {
    %c0_i32 = arith.constant 0 : i32
    %c0_i32_0 = arith.constant 0 : i32
    %c0_i32_1 = arith.constant 0 : i32
    return %arg0, %c0_i32, %c0_i32_0 : i32, i32, i32
  }
}

module attributes {stable_mosaic.version = 11 : i64} {
  func.func @encoder_kernel(%arg0: i32, %arg1: memref<1x8x32xf32, #tpu.memory_space<vmem>>, %arg2: memref<1x32xf32, #tpu.memory_space<vmem>>, %arg3: memref<1x32xf32, #tpu.memory_space<vmem>>, %arg4: memref<32x96xf32, #tpu.memory_space<vmem>>, %arg5: memref<1x96xf32, #tpu.memory_space<vmem>>, %arg6: memref<32x32xf32, #tpu.memory_space<vmem>>, %arg7: memref<1x32xf32, #tpu.memory_space<vmem>>, %arg8: memref<32x64xf32, #tpu.memory_space<vmem>>, %arg9: memref<1x64xf32, #tpu.memory_space<vmem>>, %arg10: memref<64x32xf32, #tpu.memory_space<vmem>>, %arg11: memref<1x32xf32, #tpu.memory_space<vmem>>, %arg12: memref<1x8x32xf32, #tpu.memory_space<vmem>>, %arg13: memref<8x32xf32, #tpu.memory_space<vmem>>) attributes {dimension_semantics = [#tpu.dimension_semantics<parallel>], iteration_bounds = array<i64: 4>, scalar_prefetch = 0 : i64, scratch_operands = 1 : i64, tpu.core_type = #tpu.core_type<tc>, window_params = [{transform_indices = @transform_0, window_bounds = array<i64: 1, 8, 32>}, {pipeline_mode = #tpu.pipeline_mode<synchronous>, transform_indices = @transform_1, window_bounds = array<i64: 1, 32>}, {pipeline_mode = #tpu.pipeline_mode<synchronous>, transform_indices = @transform_2, window_bounds = array<i64: 1, 32>}, {pipeline_mode = #tpu.pipeline_mode<synchronous>, transform_indices = @transform_3, window_bounds = array<i64: 32, 96>}, {pipeline_mode = #tpu.pipeline_mode<synchronous>, transform_indices = @transform_4, window_bounds = array<i64: 1, 96>}, {pipeline_mode = #tpu.pipeline_mode<synchronous>, transform_indices = @transform_5, window_bounds = array<i64: 32, 32>}, {pipeline_mode = #tpu.pipeline_mode<synchronous>, transform_indices = @transform_6, window_bounds = array<i64: 1, 32>}, {pipeline_mode = #tpu.pipeline_mode<synchronous>, transform_indices = @transform_7, window_bounds = array<i64: 32, 64>}, {pipeline_mode = #tpu.pipeline_mode<synchronous>, transform_indices = @transform_8, window_bounds = array<i64: 1, 64>}, {pipeline_mode = #tpu.pipeline_mode<synchronous>, transform_indices = @transform_9, window_bounds = array<i64: 64, 32>}, {pipeline_mode = #tpu.pipeline_mode<synchronous>, transform_indices = @transform_10, window_bounds = array<i64: 1, 32>}, {transform_indices = @transform_11, window_bounds = array<i64: 1, 8, 32>}]} {
    %c0 = arith.constant 0 : index
    %c0_0 = arith.constant 0 : index
    %c0_1 = arith.constant 0 : index
    %0 = vector.load %arg1[%c0, %c0_0, %c0_1] : memref<1x8x32xf32, #tpu.memory_space<vmem>>, vector<1x8x32xf32>
    %c0_2 = arith.constant 0 : index
    %c0_3 = arith.constant 0 : index
    %1 = vector.load %arg2[%c0_2, %c0_3] : memref<1x32xf32, #tpu.memory_space<vmem>>, vector<1x32xf32>
    %c0_4 = arith.constant 0 : index
    %c0_5 = arith.constant 0 : index
    %2 = vector.load %arg3[%c0_4, %c0_5] : memref<1x32xf32, #tpu.memory_space<vmem>>, vector<1x32xf32>
    %3 = vector.shape_cast %0 : vector<1x8x32xf32> to vector<8x32xf32>
    %cst = arith.constant dense<0.000000e+00> : vector<8xf32>
    %4 = vector.multi_reduction <add>, %3, %cst [1] : vector<8x32xf32> to vector<8xf32>
    %5 = vector.shape_cast %4 : vector<8xf32> to vector<8x1xf32>
    %cst_6 = arith.constant 3.200000e+01 : f32
    %6 = vector.broadcast %cst_6 : f32 to vector<8x1xf32>
    %7 = arith.divf %5, %6 : vector<8x1xf32>
    %8 = vector.broadcast %7 : vector<8x1xf32> to vector<8x32xf32>
    %9 = arith.subf %3, %8 : vector<8x32xf32>
    %10 = arith.mulf %9, %9 : vector<8x32xf32>
    %cst_7 = arith.constant dense<0.000000e+00> : vector<8xf32>
    %11 = vector.multi_reduction <add>, %10, %cst_7 [1] : vector<8x32xf32> to vector<8xf32>
    %12 = vector.shape_cast %11 : vector<8xf32> to vector<8x1xf32>
    %cst_8 = arith.constant 3.200000e+01 : f32
    %13 = vector.broadcast %cst_8 : f32 to vector<8x1xf32>
    %14 = arith.divf %12, %13 : vector<8x1xf32>
    %cst_9 = arith.constant 9.99999974E-6 : f32
    %15 = vector.broadcast %cst_9 : f32 to vector<8x1xf32>
    %16 = arith.addf %14, %15 : vector<8x1xf32>
    %17 = math.rsqrt %16 : vector<8x1xf32>
    %18 = vector.broadcast %17 : vector<8x1xf32> to vector<8x32xf32>
    %19 = arith.mulf %9, %18 : vector<8x32xf32>
    %20 = vector.broadcast %1 : vector<1x32xf32> to vector<8x32xf32>
    %21 = arith.mulf %19, %20 : vector<8x32xf32>
    %22 = vector.broadcast %2 : vector<1x32xf32> to vector<8x32xf32>
    %23 = arith.addf %21, %22 : vector<8x32xf32>
    %c0_10 = arith.constant 0 : index
    %c0_11 = arith.constant 0 : index
    %24 = vector.load %arg4[%c0_10, %c0_11] : memref<32x96xf32, #tpu.memory_space<vmem>>, vector<32x96xf32>
    %cst_12 = arith.constant dense<0.000000e+00> : vector<8x96xf32>
    %25 = tpu.matmul %23, %24, %cst_12 {dimension_numbers = #tpu.dot_dimension_numbers<[1], [0], [0], [1], [0, 0, 1, 1], [], []>} : vector<8x32xf32>, vector<32x96xf32>, vector<8x96xf32> -> vector<8x96xf32>
    %c0_13 = arith.constant 0 : index
    %c0_14 = arith.constant 0 : index
    %26 = vector.load %arg5[%c0_13, %c0_14] : memref<1x96xf32, #tpu.memory_space<vmem>>, vector<1x96xf32>
    %27 = vector.broadcast %26 : vector<1x96xf32> to vector<8x96xf32>
    %28 = arith.addf %25, %27 : vector<8x96xf32>
    %29 = vector.extract_strided_slice %28 {offsets = [0, 0], sizes = [8, 8], strides = [1, 1]} : vector<8x96xf32> to vector<8x8xf32>
    %30 = vector.shape_cast %29 : vector<8x8xf32> to vector<1x8x8xf32>
    %31 = vector.extract_strided_slice %28 {offsets = [0, 32], sizes = [8, 8], strides = [1, 1]} : vector<8x96xf32> to vector<8x8xf32>
    %32 = vector.shape_cast %31 : vector<8x8xf32> to vector<1x8x8xf32>
    %33 = vector.extract_strided_slice %28 {offsets = [0, 64], sizes = [8, 8], strides = [1, 1]} : vector<8x96xf32> to vector<8x8xf32>
    %34 = vector.shape_cast %33 : vector<8x8xf32> to vector<1x8x8xf32>
    "tpu.trace_start"() <{level = 10 : i32, message = "bqd,bkd->bqk"}> : () -> ()
    %cst_15 = arith.constant dense<0.000000e+00> : vector<1x8x8xf32>
    %35 = tpu.matmul %30, %32, %cst_15 {dimension_numbers = #tpu.dot_dimension_numbers<[2], [2], [1], [1], [0, 0, 0, 1, 1, 1], [0], [0]>} : vector<1x8x8xf32>, vector<1x8x8xf32>, vector<1x8x8xf32> -> vector<1x8x8xf32>
    "tpu.trace_stop"() : () -> ()
    %cst_16 = arith.constant dense<0xFF800000> : vector<1x8xf32>
    %36 = vector.multi_reduction <maximumf>, %35, %cst_16 [2] : vector<1x8x8xf32> to vector<1x8xf32>
    %37 = vector.shape_cast %36 : vector<1x8xf32> to vector<1x8x1xf32>
    %38 = vector.broadcast %37 : vector<1x8x1xf32> to vector<1x8x8xf32>
    %39 = arith.subf %35, %38 : vector<1x8x8xf32>
    %40 = math.exp %39 : vector<1x8x8xf32>
    %cst_17 = arith.constant dense<0.000000e+00> : vector<1x8xf32>
    %41 = vector.multi_reduction <add>, %40, %cst_17 [2] : vector<1x8x8xf32> to vector<1x8xf32>
    %42 = vector.shape_cast %41 : vector<1x8xf32> to vector<1x8x1xf32>
    %43 = vector.broadcast %42 : vector<1x8x1xf32> to vector<1x8x8xf32>
    %44 = arith.divf %40, %43 : vector<1x8x8xf32>
    "tpu.trace_start"() <{level = 10 : i32, message = "bqk,bkd->bqd"}> : () -> ()
    %cst_18 = arith.constant dense<0.000000e+00> : vector<1x8x8xf32>
    %45 = tpu.matmul %44, %34, %cst_18 {dimension_numbers = #tpu.dot_dimension_numbers<[2], [1], [1], [2], [0, 0, 0, 1, 1, 2], [0], [0]>} : vector<1x8x8xf32>, vector<1x8x8xf32>, vector<1x8x8xf32> -> vector<1x8x8xf32>
    "tpu.trace_stop"() : () -> ()
    %46 = vector.shape_cast %45 : vector<1x8x8xf32> to vector<8x8xf32>
    %c0_19 = arith.constant 0 : index
    %c0_20 = arith.constant 0 : index
    %47 = vector.load %arg13[%c0_19, %c0_20] : memref<8x32xf32, #tpu.memory_space<vmem>>, vector<8x8xf32>
    tpu.vector_store %arg13[%c0_19, %c0_20], %46 {strides = array<i32>} : memref<8x32xf32, #tpu.memory_space<vmem>>, vector<8x8xf32>,
    %48 = vector.extract_strided_slice %28 {offsets = [0, 8], sizes = [8, 8], strides = [1, 1]} : vector<8x96xf32> to vector<8x8xf32>
    %49 = vector.shape_cast %48 : vector<8x8xf32> to vector<1x8x8xf32>
    %50 = vector.extract_strided_slice %28 {offsets = [0, 40], sizes = [8, 8], strides = [1, 1]} : vector<8x96xf32> to vector<8x8xf32>
    %51 = vector.shape_cast %50 : vector<8x8xf32> to vector<1x8x8xf32>
    %52 = vector.extract_strided_slice %28 {offsets = [0, 72], sizes = [8, 8], strides = [1, 1]} : vector<8x96xf32> to vector<8x8xf32>
    %53 = vector.shape_cast %52 : vector<8x8xf32> to vector<1x8x8xf32>
    "tpu.trace_start"() <{level = 10 : i32, message = "bqd,bkd->bqk"}> : () -> ()
    %cst_21 = arith.constant dense<0.000000e+00> : vector<1x8x8xf32>
    %54 = tpu.matmul %49, %51, %cst_21 {dimension_numbers = #tpu.dot_dimension_numbers<[2], [2], [1], [1], [0, 0, 0, 1, 1, 1], [0], [0]>} : vector<1x8x8xf32>, vector<1x8x8xf32>, vector<1x8x8xf32> -> vector<1x8x8xf32>
    "tpu.trace_stop"() : () -> ()
    %cst_22 = arith.constant dense<0xFF800000> : vector<1x8xf32>
    %55 = vector.multi_reduction <maximumf>, %54, %cst_22 [2] : vector<1x8x8xf32> to vector<1x8xf32>
    %56 = vector.shape_cast %55 : vector<1x8xf32> to vector<1x8x1xf32>
    %57 = vector.broadcast %56 : vector<1x8x1xf32> to vector<1x8x8xf32>
    %58 = arith.subf %54, %57 : vector<1x8x8xf32>
    %59 = math.exp %58 : vector<1x8x8xf32>
    %cst_23 = arith.constant dense<0.000000e+00> : vector<1x8xf32>
    %60 = vector.multi_reduction <add>, %59, %cst_23 [2] : vector<1x8x8xf32> to vector<1x8xf32>
    %61 = vector.shape_cast %60 : vector<1x8xf32> to vector<1x8x1xf32>
    %62 = vector.broadcast %61 : vector<1x8x1xf32> to vector<1x8x8xf32>
    %63 = arith.divf %59, %62 : vector<1x8x8xf32>
    "tpu.trace_start"() <{level = 10 : i32, message = "bqk,bkd->bqd"}> : () -> ()
    %cst_24 = arith.constant dense<0.000000e+00> : vector<1x8x8xf32>
    %64 = tpu.matmul %63, %53, %cst_24 {dimension_numbers = #tpu.dot_dimension_numbers<[2], [1], [1], [2], [0, 0, 0, 1, 1, 2], [0], [0]>} : vector<1x8x8xf32>, vector<1x8x8xf32>, vector<1x8x8xf32> -> vector<1x8x8xf32>
    "tpu.trace_stop"() : () -> ()
    %65 = vector.shape_cast %64 : vector<1x8x8xf32> to vector<8x8xf32>
    %c0_25 = arith.constant 0 : index
    %c8 = arith.constant 8 : index
    %66 = vector.load %arg13[%c0_25, %c8] : memref<8x32xf32, #tpu.memory_space<vmem>>, vector<8x8xf32>
    tpu.vector_store %arg13[%c0_25, %c8], %65 {strides = array<i32>} : memref<8x32xf32, #tpu.memory_space<vmem>>, vector<8x8xf32>,
    %67 = vector.extract_strided_slice %28 {offsets = [0, 16], sizes = [8, 8], strides = [1, 1]} : vector<8x96xf32> to vector<8x8xf32>
    %68 = vector.shape_cast %67 : vector<8x8xf32> to vector<1x8x8xf32>
    %69 = vector.extract_strided_slice %28 {offsets = [0, 48], sizes = [8, 8], strides = [1, 1]} : vector<8x96xf32> to vector<8x8xf32>
    %70 = vector.shape_cast %69 : vector<8x8xf32> to vector<1x8x8xf32>
    %71 = vector.extract_strided_slice %28 {offsets = [0, 80], sizes = [8, 8], strides = [1, 1]} : vector<8x96xf32> to vector<8x8xf32>
    %72 = vector.shape_cast %71 : vector<8x8xf32> to vector<1x8x8xf32>
    "tpu.trace_start"() <{level = 10 : i32, message = "bqd,bkd->bqk"}> : () -> ()
    %cst_26 = arith.constant dense<0.000000e+00> : vector<1x8x8xf32>
    %73 = tpu.matmul %68, %70, %cst_26 {dimension_numbers = #tpu.dot_dimension_numbers<[2], [2], [1], [1], [0, 0, 0, 1, 1, 1], [0], [0]>} : vector<1x8x8xf32>, vector<1x8x8xf32>, vector<1x8x8xf32> -> vector<1x8x8xf32>
    "tpu.trace_stop"() : () -> ()
    %cst_27 = arith.constant dense<0xFF800000> : vector<1x8xf32>
    %74 = vector.multi_reduction <maximumf>, %73, %cst_27 [2] : vector<1x8x8xf32> to vector<1x8xf32>
    %75 = vector.shape_cast %74 : vector<1x8xf32> to vector<1x8x1xf32>
    %76 = vector.broadcast %75 : vector<1x8x1xf32> to vector<1x8x8xf32>
    %77 = arith.subf %73, %76 : vector<1x8x8xf32>
    %78 = math.exp %77 : vector<1x8x8xf32>
    %cst_28 = arith.constant dense<0.000000e+00> : vector<1x8xf32>
    %79 = vector.multi_reduction <add>, %78, %cst_28 [2] : vector<1x8x8xf32> to vector<1x8xf32>
    %80 = vector.shape_cast %79 : vector<1x8xf32> to vector<1x8x1xf32>
    %81 = vector.broadcast %80 : vector<1x8x1xf32> to vector<1x8x8xf32>
    %82 = arith.divf %78, %81 : vector<1x8x8xf32>
    "tpu.trace_start"() <{level = 10 : i32, message = "bqk,bkd->bqd"}> : () -> ()
    %cst_29 = arith.constant dense<0.000000e+00> : vector<1x8x8xf32>
    %83 = tpu.matmul %82, %72, %cst_29 {dimension_numbers = #tpu.dot_dimension_numbers<[2], [1], [1], [2], [0, 0, 0, 1, 1, 2], [0], [0]>} : vector<1x8x8xf32>, vector<1x8x8xf32>, vector<1x8x8xf32> -> vector<1x8x8xf32>
    "tpu.trace_stop"() : () -> ()
    %84 = vector.shape_cast %83 : vector<1x8x8xf32> to vector<8x8xf32>
    %c0_30 = arith.constant 0 : index
    %c16 = arith.constant 16 : index
    %85 = vector.load %arg13[%c0_30, %c16] : memref<8x32xf32, #tpu.memory_space<vmem>>, vector<8x8xf32>
    tpu.vector_store %arg13[%c0_30, %c16], %84 {strides = array<i32>} : memref<8x32xf32, #tpu.memory_space<vmem>>, vector<8x8xf32>,
    %86 = vector.extract_strided_slice %28 {offsets = [0, 24], sizes = [8, 8], strides = [1, 1]} : vector<8x96xf32> to vector<8x8xf32>
    %87 = vector.shape_cast %86 : vector<8x8xf32> to vector<1x8x8xf32>
    %88 = vector.extract_strided_slice %28 {offsets = [0, 56], sizes = [8, 8], strides = [1, 1]} : vector<8x96xf32> to vector<8x8xf32>
    %89 = vector.shape_cast %88 : vector<8x8xf32> to vector<1x8x8xf32>
    %90 = vector.extract_strided_slice %28 {offsets = [0, 88], sizes = [8, 8], strides = [1, 1]} : vector<8x96xf32> to vector<8x8xf32>
    %91 = vector.shape_cast %90 : vector<8x8xf32> to vector<1x8x8xf32>
    "tpu.trace_start"() <{level = 10 : i32, message = "bqd,bkd->bqk"}> : () -> ()
    %cst_31 = arith.constant dense<0.000000e+00> : vector<1x8x8xf32>
    %92 = tpu.matmul %87, %89, %cst_31 {dimension_numbers = #tpu.dot_dimension_numbers<[2], [2], [1], [1], [0, 0, 0, 1, 1, 1], [0], [0]>} : vector<1x8x8xf32>, vector<1x8x8xf32>, vector<1x8x8xf32> -> vector<1x8x8xf32>
    "tpu.trace_stop"() : () -> ()
    %cst_32 = arith.constant dense<0xFF800000> : vector<1x8xf32>
    %93 = vector.multi_reduction <maximumf>, %92, %cst_32 [2] : vector<1x8x8xf32> to vector<1x8xf32>
    %94 = vector.shape_cast %93 : vector<1x8xf32> to vector<1x8x1xf32>
    %95 = vector.broadcast %94 : vector<1x8x1xf32> to vector<1x8x8xf32>
    %96 = arith.subf %92, %95 : vector<1x8x8xf32>
    %97 = math.exp %96 : vector<1x8x8xf32>
    %cst_33 = arith.constant dense<0.000000e+00> : vector<1x8xf32>
    %98 = vector.multi_reduction <add>, %97, %cst_33 [2] : vector<1x8x8xf32> to vector<1x8xf32>
    %99 = vector.shape_cast %98 : vector<1x8xf32> to vector<1x8x1xf32>
    %100 = vector.broadcast %99 : vector<1x8x1xf32> to vector<1x8x8xf32>
    %101 = arith.divf %97, %100 : vector<1x8x8xf32>
    "tpu.trace_start"() <{level = 10 : i32, message = "bqk,bkd->bqd"}> : () -> ()
    %cst_34 = arith.constant dense<0.000000e+00> : vector<1x8x8xf32>
    %102 = tpu.matmul %101, %91, %cst_34 {dimension_numbers = #tpu.dot_dimension_numbers<[2], [1], [1], [2], [0, 0, 0, 1, 1, 2], [0], [0]>} : vector<1x8x8xf32>, vector<1x8x8xf32>, vector<1x8x8xf32> -> vector<1x8x8xf32>
    "tpu.trace_stop"() : () -> ()
    %103 = vector.shape_cast %102 : vector<1x8x8xf32> to vector<8x8xf32>
    %c0_35 = arith.constant 0 : index
    %c24 = arith.constant 24 : index
    %104 = vector.load %arg13[%c0_35, %c24] : memref<8x32xf32, #tpu.memory_space<vmem>>, vector<8x8xf32>
    tpu.vector_store %arg13[%c0_35, %c24], %103 {strides = array<i32>} : memref<8x32xf32, #tpu.memory_space<vmem>>, vector<8x8xf32>,
    %c0_36 = arith.constant 0 : index
    %c0_37 = arith.constant 0 : index
    %105 = vector.load %arg13[%c0_36, %c0_37] : memref<8x32xf32, #tpu.memory_space<vmem>>, vector<8x32xf32>
    %c0_38 = arith.constant 0 : index
    %c0_39 = arith.constant 0 : index
    %106 = vector.load %arg6[%c0_38, %c0_39] : memref<32x32xf32, #tpu.memory_space<vmem>>, vector<32x32xf32>
    %cst_40 = arith.constant dense<0.000000e+00> : vector<8x32xf32>
    %107 = tpu.matmul %105, %106, %cst_40 {dimension_numbers = #tpu.dot_dimension_numbers<[1], [0], [0], [1], [0, 0, 1, 1], [], []>} : vector<8x32xf32>, vector<32x32xf32>, vector<8x32xf32> -> vector<8x32xf32>
    %c0_41 = arith.constant 0 : index
    %c0_42 = arith.constant 0 : index
    %108 = vector.load %arg7[%c0_41, %c0_42] : memref<1x32xf32, #tpu.memory_space<vmem>>, vector<1x32xf32>
    %109 = vector.broadcast %108 : vector<1x32xf32> to vector<8x32xf32>
    %110 = arith.addf %107, %109 : vector<8x32xf32>
    %111 = arith.addf %110, %3 : vector<8x32xf32>
    %cst_43 = arith.constant dense<0.000000e+00> : vector<8xf32>
    %112 = vector.multi_reduction <add>, %111, %cst_43 [1] : vector<8x32xf32> to vector<8xf32>
    %113 = vector.shape_cast %112 : vector<8xf32> to vector<8x1xf32>
    %cst_44 = arith.constant 3.200000e+01 : f32
    %114 = vector.broadcast %cst_44 : f32 to vector<8x1xf32>
    %115 = arith.divf %113, %114 : vector<8x1xf32>
    %116 = vector.broadcast %115 : vector<8x1xf32> to vector<8x32xf32>
    %117 = arith.subf %111, %116 : vector<8x32xf32>
    %118 = arith.mulf %117, %117 : vector<8x32xf32>
    %cst_45 = arith.constant dense<0.000000e+00> : vector<8xf32>
    %119 = vector.multi_reduction <add>, %118, %cst_45 [1] : vector<8x32xf32> to vector<8xf32>
    %120 = vector.shape_cast %119 : vector<8xf32> to vector<8x1xf32>
    %cst_46 = arith.constant 3.200000e+01 : f32
    %121 = vector.broadcast %cst_46 : f32 to vector<8x1xf32>
    %122 = arith.divf %120, %121 : vector<8x1xf32>
    %cst_47 = arith.constant 9.99999974E-6 : f32
    %123 = vector.broadcast %cst_47 : f32 to vector<8x1xf32>
    %124 = arith.addf %122, %123 : vector<8x1xf32>
    %125 = math.rsqrt %124 : vector<8x1xf32>
    %126 = vector.broadcast %125 : vector<8x1xf32> to vector<8x32xf32>
    %127 = arith.mulf %117, %126 : vector<8x32xf32>
    %128 = vector.broadcast %1 : vector<1x32xf32> to vector<8x32xf32>
    %129 = arith.mulf %127, %128 : vector<8x32xf32>
    %130 = vector.broadcast %2 : vector<1x32xf32> to vector<8x32xf32>
    %131 = arith.addf %129, %130 : vector<8x32xf32>
    %c0_48 = arith.constant 0 : index
    %c0_49 = arith.constant 0 : index
    %132 = vector.load %arg8[%c0_48, %c0_49] : memref<32x64xf32, #tpu.memory_space<vmem>>, vector<32x64xf32>
    %cst_50 = arith.constant dense<0.000000e+00> : vector<8x64xf32>
    %133 = tpu.matmul %131, %132, %cst_50 {dimension_numbers = #tpu.dot_dimension_numbers<[1], [0], [0], [1], [0, 0, 1, 1], [], []>} : vector<8x32xf32>, vector<32x64xf32>, vector<8x64xf32> -> vector<8x64xf32>
    %c0_51 = arith.constant 0 : index
    %c0_52 = arith.constant 0 : index
    %134 = vector.load %arg9[%c0_51, %c0_52] : memref<1x64xf32, #tpu.memory_space<vmem>>, vector<1x64xf32>
    %135 = vector.broadcast %134 : vector<1x64xf32> to vector<8x64xf32>
    %136 = arith.addf %133, %135 : vector<8x64xf32>
    %cst_53 = arith.constant 5.000000e-01 : f32
    %137 = vector.broadcast %cst_53 : f32 to vector<8x64xf32>
    %138 = arith.mulf %137, %136 : vector<8x64xf32>
    %cst_54 = arith.constant 4.471500e-02 : f32
    %139 = vector.broadcast %cst_54 : f32 to vector<8x64xf32>
    %140 = arith.mulf %139, %136 : vector<8x64xf32>
    %141 = arith.mulf %140, %136 : vector<8x64xf32>
    %142 = arith.mulf %141, %136 : vector<8x64xf32>
    %143 = arith.addf %136, %142 : vector<8x64xf32>
    %cst_55 = arith.constant 0.797884583 : f32
    %144 = vector.broadcast %cst_55 : f32 to vector<8x64xf32>
    %145 = arith.mulf %144, %143 : vector<8x64xf32>
    %146 = math.tanh %145 : vector<8x64xf32>
    %cst_56 = arith.constant 1.000000e+00 : f32
    %147 = vector.broadcast %cst_56 : f32 to vector<8x64xf32>
    %148 = arith.addf %147, %146 : vector<8x64xf32>
    %149 = arith.mulf %138, %148 : vector<8x64xf32>
    %c0_57 = arith.constant 0 : index
    %c0_58 = arith.constant 0 : index
    %150 = vector.load %arg10[%c0_57, %c0_58] : memref<64x32xf32, #tpu.memory_space<vmem>>, vector<64x32xf32>
    %cst_59 = arith.constant dense<0.000000e+00> : vector<8x32xf32>
    %151 = tpu.matmul %149, %150, %cst_59 {dimension_numbers = #tpu.dot_dimension_numbers<[1], [0], [0], [1], [0, 0, 1, 1], [], []>} : vector<8x64xf32>, vector<64x32xf32>, vector<8x32xf32> -> vector<8x32xf32>
    %c0_60 = arith.constant 0 : index
    %c0_61 = arith.constant 0 : index
    %152 = vector.load %arg11[%c0_60, %c0_61] : memref<1x32xf32, #tpu.memory_space<vmem>>, vector<1x32xf32>
    %153 = vector.broadcast %152 : vector<1x32xf32> to vector<8x32xf32>
    %154 = arith.addf %151, %153 : vector<8x32xf32>
    %155 = arith.addf %154, %111 : vector<8x32xf32>
    %156 = vector.shape_cast %155 : vector<8x32xf32> to vector<1x8x32xf32>
    %c0_62 = arith.constant 0 : index
    %c0_63 = arith.constant 0 : index
    %c0_64 = arith.constant 0 : index
    %157 = vector.load %arg12[%c0_62, %c0_63, %c0_64] : memref<1x8x32xf32, #tpu.memory_space<vmem>>, vector<1x8x32xf32>
    tpu.vector_store %arg12[%c0_62, %c0_63, %c0_64], %156 {strides = array<i32>} : memref<1x8x32xf32, #tpu.memory_space<vmem>>, vector<1x8x32xf32>,
    return
  }
  func.func @transform_0(%arg0: i32) -> (i32, i32, i32) {
    %c0_i32 = arith.constant 0 : i32
    %c0_i32_0 = arith.constant 0 : i32
    %c0_i32_1 = arith.constant 0 : i32
    return %arg0, %c0_i32, %c0_i32_0 : i32, i32, i32
  }
  func.func @transform_1(%arg0: i32) -> (i32, i32) {
    %c0_i32 = arith.constant 0 : i32
    %c0_i32_0 = arith.constant 0 : i32
    %c0_i32_1 = arith.constant 0 : i32
    return %c0_i32, %c0_i32_0 : i32, i32
  }
  func.func @transform_2(%arg0: i32) -> (i32, i32) {
    %c0_i32 = arith.constant 0 : i32
    %c0_i32_0 = arith.constant 0 : i32
    %c0_i32_1 = arith.constant 0 : i32
    return %c0_i32, %c0_i32_0 : i32, i32
  }
  func.func @transform_3(%arg0: i32) -> (i32, i32) {
    %c0_i32 = arith.constant 0 : i32
    %c0_i32_0 = arith.constant 0 : i32
    %c0_i32_1 = arith.constant 0 : i32
    return %c0_i32, %c0_i32_0 : i32, i32
  }
  func.func @transform_4(%arg0: i32) -> (i32, i32) {
    %c0_i32 = arith.constant 0 : i32
    %c0_i32_0 = arith.constant 0 : i32
    %c0_i32_1 = arith.constant 0 : i32
    return %c0_i32, %c0_i32_0 : i32, i32
  }
  func.func @transform_5(%arg0: i32) -> (i32, i32) {
    %c0_i32 = arith.constant 0 : i32
    %c0_i32_0 = arith.constant 0 : i32
    %c0_i32_1 = arith.constant 0 : i32
    return %c0_i32, %c0_i32_0 : i32, i32
  }
  func.func @transform_6(%arg0: i32) -> (i32, i32) {
    %c0_i32 = arith.constant 0 : i32
    %c0_i32_0 = arith.constant 0 : i32
    %c0_i32_1 = arith.constant 0 : i32
    return %c0_i32, %c0_i32_0 : i32, i32
  }
  func.func @transform_7(%arg0: i32) -> (i32, i32) {
    %c0_i32 = arith.constant 0 : i32
    %c0_i32_0 = arith.constant 0 : i32
    %c0_i32_1 = arith.constant 0 : i32
    return %c0_i32, %c0_i32_0 : i32, i32
  }
  func.func @transform_8(%arg0: i32) -> (i32, i32) {
    %c0_i32 = arith.constant 0 : i32
    %c0_i32_0 = arith.constant 0 : i32
    %c0_i32_1 = arith.constant 0 : i32
    return %c0_i32, %c0_i32_0 : i32, i32
  }
  func.func @transform_9(%arg0: i32) -> (i32, i32) {
    %c0_i32 = arith.constant 0 : i32
    %c0_i32_0 = arith.constant 0 : i32
    %c0_i32_1 = arith.constant 0 : i32
    return %c0_i32, %c0_i32_0 : i32, i32
  }
  func.func @transform_10(%arg0: i32) -> (i32, i32) {
    %c0_i32 = arith.constant 0 : i32
    %c0_i32_0 = arith.constant 0 : i32
    %c0_i32_1 = arith.constant 0 : i32
    return %c0_i32, %c0_i32_0 : i32, i32
  }
  func.func @transform_11(%arg0: i32) -> (i32, i32, i32) {
    %c0_i32 = arith.constant 0 : i32
    %c0_i32_0 = arith.constant 0 : i32
    %c0_i32_1 = arith.constant 0 : i32
    return %arg0, %c0_i32, %c0_i32_0 : i32, i32, i32
  }
}

</mosaic_0001>

<llo_original>
// kernel: tpu_custom_call.1
$region0: #{tpu_custom_call.1}
  #allocation0 [shape = 'u32[]', space=smem, size = 0x4, offset = 0x4, fixed_abs, tag = 'smem constant byte address 0x4 - core index']
  #allocation1 [shape = 'u32[72,128]{1,0:T(1,128)}', space=vmem, size = 0x9000, scoped, tag = 'internal scratch']
  #allocation2 [shape = 'f32[8,32]{1,0:T(8,128)}', space=vmem, size = 0x1000, scoped, tag = 'scratch operand']
  %s0 = inlined_call_operand.vmem [shape: f32[4,8,32], index: 0, kind: input, shape index: {}]
  %s1 = inlined_call_operand.hbm [shape: f32[1,32], index: 1, kind: input, shape index: {}]
  %s2 = inlined_call_operand.vmem [shape: f32[1,32], index: 2, kind: input, shape index: {}]
  %s3 = inlined_call_operand.vmem [shape: f32[32,96], index: 3, kind: input, shape index: {}]
  %s4 = inlined_call_operand.vmem [shape: f32[1,96], index: 4, kind: input, shape index: {}]
  %s5 = inlined_call_operand.vmem [shape: f32[32,32], index: 5, kind: input, shape index: {}]
  %s6 = inlined_call_operand.vmem [shape: f32[1,32], index: 6, kind: input, shape index: {}]
  %s7 = inlined_call_operand.hbm [shape: f32[32,64], index: 7, kind: input, shape index: {}]
  %s8 = inlined_call_operand.vmem [shape: f32[1,64], index: 8, kind: input, shape index: {}]
  %s9 = inlined_call_operand.vmem [shape: f32[64,32], index: 9, kind: input, shape index: {}]
  %s10 = inlined_call_operand.vmem [shape: f32[1,32], index: 10, kind: input, shape index: {}]
  %s11 = inlined_call_operand.hbm [shape: f32[4,8,32], index: 11, kind: output, shape index: {}]
  %s12 = sld [smem:[#allocation0]]
  $region85: #{tpu_custom_call.1} parent=0
    _
  %s14 = ssub.s32 1, %s12
  %s15 = scalar_select 0, %s14, %s12
  $region1: #{tpu_custom_call.1} parent=0
    #allocation3 [shape = 'u8[512]{0}', space=vmem, size = 0x400, scoped, tag = 'input window, operand 1, single buffered']
    #allocation4 [shape = 's32[2]{0}', space=sflag, size = 0x8, scoped, tag = 'scoped memory for tpu_custom_call.1']
    #allocation5 [shape = 's32[2]{0}', space=sflag, size = 0x8, scoped, tag = 'scoped memory for tpu_custom_call.1']
    #allocation6 [shape = 'u8[16384]{0}', space=vmem, size = 0x4000, scoped, tag = 'input window, operand 7, single buffered']
    #allocation7 [shape = 's32[1]{0}', space=sflag, size = 0x4, scoped, tag = 'scoped memory for tpu_custom_call.1']
    #allocation8 [shape = 'u8[8192]{0}', space=vmem, size = 0x2000, scoped, tag = 'output window, operand 0']
    %16 = vsyncpa [#allocation4], 0
    %17 = vsyncpa [#allocation7], 0
    %18 = vsyncpa [#allocation5], 0
    %s19 = scalar_lea.sflag [#allocation5], 1
    %20 = vsyncpa %s19, 0
    loop: start=0, step=1, limit=6
    $region2: #{tpu_custom_call.1} parent=1 // loop_pre_header
      _
    $region3: #{tpu_custom_call.1} parent=1 // loop_header
      %s22 = sphi 0, %s26
      %p23 = scmp.ge.s32.totalorder %s22, 6
      %s32 = sphi 0, %s34
      %s35 = sphi 0, %s32
      %s36 = sphi 0, %s35
      %s52 = sphi 0, %s36
      %s56 = sphi 0, %s56
      %s58 = sphi 0, %s56
      %s59 = sphi 0, %s58
      %s73 = sphi 0, %s59
      %s77 = sphi 0, %s77
      %s79 = sphi 0, %s77
      %s80 = sphi 0, %s79
      %s94 = sphi 0, %s80
      %s98 = sphi 0, %s98
      %s100 = sphi 0, %s98
      %s101 = sphi 0, %s100
      %s115 = sphi 0, %s101
      %s119 = sphi 0, %s119
      %s121 = sphi 0, %s119
      %s122 = sphi 0, %s121
      %s136 = sphi 0, %s122
      %s140 = sphi 0, %s140
      %s142 = sphi 0, %s140
      %s143 = sphi 0, %s142
      %s157 = sphi 0, %s143
      %s161 = sphi 0, %s161
      %s163 = sphi 0, %s161
      %s164 = sphi 0, %s163
      %s178 = sphi 0, %s164
      %s182 = sphi 0, %s182
      %s184 = sphi 0, %s182
      %s185 = sphi 0, %s184
      %s199 = sphi 0, %s185
      %s203 = sphi 0, %s203
      %s205 = sphi 0, %s203
      %s206 = sphi 0, %s205
      %s220 = sphi 0, %s206
      %s224 = sphi 0, %s224
      %s226 = sphi 0, %s224
      %s227 = sphi 0, %s226
      %s241 = sphi 0, %s227
      %s245 = sphi 0, %s245
      %s247 = sphi 0, %s245
      %s248 = sphi 0, %s247
      %s262 = sphi 0, %s248
      %s268 = sphi 0, %s270
      %s271 = sphi 0, %s268
      %s272 = sphi 0, %s271
      %s288 = sphi 0, %s272
    $region4: #{tpu_custom_call.1} parent=1 // loop_header_branch
      %25 = sbr.rel (%p23) target = $region8
    $region5: #{tpu_custom_call.1} parent=1 // loop_body
      %s27 = ssub.s32 %s22, 1
      %s28 = ssub.s32 %s22, 2
      %s29 = sadd.s32 %s22, 1
      %s30 = ssub.s32 %s22, %s29
      %p31 = scmp.eq.s32.totalorder %s30, 0
      %s33 = sadd.s32 %s32, 1
      %s34 = scalar_select %p31, %s32, %s33
      %p37 = pneg %p31
      %p38 = scmp.eq.s32.totalorder %s22, 3
      %p39 = por %p37, %p38
      %p40 = scmp.ne.s32.totalorder %s32, %s35
      %p41 = scmp.eq.s32.totalorder %s22, 0
      %p42 = por %p40, %p41
      %p43 = scmp.ne.s32.totalorder %s32, %s35
      %p44 = scmp.eq.s32.totalorder %s27, 3
      %p45 = por %p43, %p44
      %p46 = scmp.ne.s32.totalorder %s35, %s36
      %p47 = scmp.eq.s32.totalorder %s27, 0
      %p48 = por %p46, %p47
      %p49 = scmp.ne.s32.totalorder %s35, %s36
      %p50 = scmp.eq.s32.totalorder %s28, 3
      %p51 = por %p49, %p50
      %p53 = scmp.ne.s32.totalorder %s36, %s52
      %p54 = scmp.eq.s32.totalorder %s28, 0
      %p55 = por %p53, %p54
      %s57 = sadd.s32 %s56, 1
      %p60 = scmp.eq.s32.totalorder %s22, 3
      %p61 = scmp.ne.s32.totalorder %s56, %s58
      %p62 = scmp.eq.s32.totalorder %s22, 0
      %p63 = por %p61, %p62
      %p64 = scmp.ne.s32.totalorder %s56, %s58
      %p65 = scmp.eq.s32.totalorder %s27, 3
      %p66 = por %p64, %p65
      %p67 = scmp.ne.s32.totalorder %s58, %s59
      %p68 = scmp.eq.s32.totalorder %s27, 0
      %p69 = por %p67, %p68
      %p70 = scmp.ne.s32.totalorder %s58, %s59
      %p71 = scmp.eq.s32.totalorder %s28, 3
      %p72 = por %p70, %p71
      %p74 = scmp.ne.s32.totalorder %s59, %s73
      %p75 = scmp.eq.s32.totalorder %s28, 0
      %p76 = por %p74, %p75
      %s78 = sadd.s32 %s77, 1
      %p81 = scmp.eq.s32.totalorder %s22, 3
      %p82 = scmp.ne.s32.totalorder %s77, %s79
      %p83 = scmp.eq.s32.totalorder %s22, 0
      %p84 = por %p82, %p83
      %p85 = scmp.ne.s32.totalorder %s77, %s79
      %p86 = scmp.eq.s32.totalorder %s27, 3
      %p87 = por %p85, %p86
      %p88 = scmp.ne.s32.totalorder %s79, %s80
      %p89 = scmp.eq.s32.totalorder %s27, 0
      %p90 = por %p88, %p89
      %p91 = scmp.ne.s32.totalorder %s79, %s80
      %p92 = scmp.eq.s32.totalorder %s28, 3
      %p93 = por %p91, %p92
      %p95 = scmp.ne.s32.totalorder %s80, %s94
      %p96 = scmp.eq.s32.totalorder %s28, 0
      %p97 = por %p95, %p96
      %s99 = sadd.s32 %s98, 1
      %p102 = scmp.eq.s32.totalorder %s22, 3
      %p103 = scmp.ne.s32.totalorder %s98, %s100
      %p104 = scmp.eq.s32.totalorder %s22, 0
      %p105 = por %p103, %p104
      %p106 = scmp.ne.s32.totalorder %s98, %s100
      %p107 = scmp.eq.s32.totalorder %s27, 3
      %p108 = por %p106, %p107
      %p109 = scmp.ne.s32.totalorder %s100, %s101
      %p110 = scmp.eq.s32.totalorder %s27, 0
      %p111 = por %p109, %p110
      %p112 = scmp.ne.s32.totalorder %s100, %s101
      %p113 = scmp.eq.s32.totalorder %s28, 3
      %p114 = por %p112, %p113
      %p116 = scmp.ne.s32.totalorder %s101, %s115
      %p117 = scmp.eq.s32.totalorder %s28, 0
      %p118 = por %p116, %p117
      %s120 = sadd.s32 %s119, 1
      %p123 = scmp.eq.s32.totalorder %s22, 3
      %p124 = scmp.ne.s32.totalorder %s119, %s121
      %p125 = scmp.eq.s32.totalorder %s22, 0
      %p126 = por %p124, %p125
      %p127 = scmp.ne.s32.totalorder %s119, %s121
      %p128 = scmp.eq.s32.totalorder %s27, 3
      %p129 = por %p127, %p128
      %p130 = scmp.ne.s32.totalorder %s121, %s122
      %p131 = scmp.eq.s32.totalorder %s27, 0
      %p132 = por %p130, %p131
      %p133 = scmp.ne.s32.totalorder %s121, %s122
      %p134 = scmp.eq.s32.totalorder %s28, 3
      %p135 = por %p133, %p134
      %p137 = scmp.ne.s32.totalorder %s122, %s136
      %p138 = scmp.eq.s32.totalorder %s28, 0
      %p139 = por %p137, %p138
      %s141 = sadd.s32 %s140, 1
      %p144 = scmp.eq.s32.totalorder %s22, 3
      %p145 = scmp.ne.s32.totalorder %s140, %s142
      %p146 = scmp.eq.s32.totalorder %s22, 0
      %p147 = por %p145, %p146
      %p148 = scmp.ne.s32.totalorder %s140, %s142
      %p149 = scmp.eq.s32.totalorder %s27, 3
      %p150 = por %p148, %p149
      %p151 = scmp.ne.s32.totalorder %s142, %s143
      %p152 = scmp.eq.s32.totalorder %s27, 0
      %p153 = por %p151, %p152
      %p154 = scmp.ne.s32.totalorder %s142, %s143
      %p155 = scmp.eq.s32.totalorder %s28, 3
      %p156 = por %p154, %p155
      %p158 = scmp.ne.s32.totalorder %s143, %s157
      %p159 = scmp.eq.s32.totalorder %s28, 0
      %p160 = por %p158, %p159
      %s162 = sadd.s32 %s161, 1
      %p165 = scmp.eq.s32.totalorder %s22, 3
      %p166 = scmp.ne.s32.totalorder %s161, %s163
      %p167 = scmp.eq.s32.totalorder %s22, 0
      %p168 = por %p166, %p167
      %p169 = scmp.ne.s32.totalorder %s161, %s163
      %p170 = scmp.eq.s32.totalorder %s27, 3
      %p171 = por %p169, %p170
      %p172 = scmp.ne.s32.totalorder %s163, %s164
      %p173 = scmp.eq.s32.totalorder %s27, 0
      %p174 = por %p172, %p173
      %p175 = scmp.ne.s32.totalorder %s163, %s164
      %p176 = scmp.eq.s32.totalorder %s28, 3
      %p177 = por %p175, %p176
      %p179 = scmp.ne.s32.totalorder %s164, %s178
      %p180 = scmp.eq.s32.totalorder %s28, 0
      %p181 = por %p179, %p180
      %s183 = sadd.s32 %s182, 1
      %p186 = scmp.eq.s32.totalorder %s22, 3
      %p187 = scmp.ne.s32.totalorder %s182, %s184
      %p188 = scmp.eq.s32.totalorder %s22, 0
      %p189 = por %p187, %p188
      %p190 = scmp.ne.s32.totalorder %s182, %s184
      %p191 = scmp.eq.s32.totalorder %s27, 3
      %p192 = por %p190, %p191
      %p193 = scmp.ne.s32.totalorder %s184, %s185
      %p194 = scmp.eq.s32.totalorder %s27, 0
      %p195 = por %p193, %p194
      %p196 = scmp.ne.s32.totalorder %s184, %s185
      %p197 = scmp.eq.s32.totalorder %s28, 3
      %p198 = por %p196, %p197
      %p200 = scmp.ne.s32.totalorder %s185, %s199
      %p201 = scmp.eq.s32.totalorder %s28, 0
      %p202 = por %p200, %p201
      %s204 = sadd.s32 %s203, 1
      %p207 = scmp.eq.s32.totalorder %s22, 3
      %p208 = scmp.ne.s32.totalorder %s203, %s205
      %p209 = scmp.eq.s32.totalorder %s22, 0
      %p210 = por %p208, %p209
      %p211 = scmp.ne.s32.totalorder %s203, %s205
      %p212 = scmp.eq.s32.totalorder %s27, 3
      %p213 = por %p211, %p212
      %p214 = scmp.ne.s32.totalorder %s205, %s206
      %p215 = scmp.eq.s32.totalorder %s27, 0
      %p216 = por %p214, %p215
      %p217 = scmp.ne.s32.totalorder %s205, %s206
      %p218 = scmp.eq.s32.totalorder %s28, 3
      %p219 = por %p217, %p218
      %p221 = scmp.ne.s32.totalorder %s206, %s220
      %p222 = scmp.eq.s32.totalorder %s28, 0
      %p223 = por %p221, %p222
      %s225 = sadd.s32 %s224, 1
      %p228 = scmp.eq.s32.totalorder %s22, 3
      %p229 = scmp.ne.s32.totalorder %s224, %s226
      %p230 = scmp.eq.s32.totalorder %s22, 0
      %p231 = por %p229, %p230
      %p232 = scmp.ne.s32.totalorder %s224, %s226
      %p233 = scmp.eq.s32.totalorder %s27, 3
      %p234 = por %p232, %p233
      %p235 = scmp.ne.s32.totalorder %s226, %s227
      %p236 = scmp.eq.s32.totalorder %s27, 0
      %p237 = por %p235, %p236
      %p238 = scmp.ne.s32.totalorder %s226, %s227
      %p239 = scmp.eq.s32.totalorder %s28, 3
      %p240 = por %p238, %p239
      %p242 = scmp.ne.s32.totalorder %s227, %s241
      %p243 = scmp.eq.s32.totalorder %s28, 0
      %p244 = por %p242, %p243
      %s246 = sadd.s32 %s245, 1
      %p249 = scmp.eq.s32.totalorder %s22, 3
      %p250 = scmp.ne.s32.totalorder %s245, %s247
      %p251 = scmp.eq.s32.totalorder %s22, 0
      %p252 = por %p250, %p251
      %p253 = scmp.ne.s32.totalorder %s245, %s247
      %p254 = scmp.eq.s32.totalorder %s27, 3
      %p255 = por %p253, %p254
      %p256 = scmp.ne.s32.totalorder %s247, %s248
      %p257 = scmp.eq.s32.totalorder %s27, 0
      %p258 = por %p256, %p257
      %p259 = scmp.ne.s32.totalorder %s247, %s248
      %p260 = scmp.eq.s32.totalorder %s28, 3
      %p261 = por %p259, %p260
      %p263 = scmp.ne.s32.totalorder %s248, %s262
      %p264 = scmp.eq.s32.totalorder %s28, 0
      %p265 = por %p263, %p264
      %s266 = ssub.s32 %s22, %s29
      %p267 = scmp.eq.s32.totalorder %s266, 0
      %s269 = sadd.s32 %s268, 1
      %s270 = scalar_select %p267, %s268, %s269
      %p273 = pneg %p267
      %p274 = scmp.eq.s32.totalorder %s22, 3
      %p275 = por %p273, %p274
      %p276 = scmp.ne.s32.totalorder %s268, %s271
      %p277 = scmp.eq.s32.totalorder %s22, 0
      %p278 = por %p276, %p277
      %p279 = scmp.ne.s32.totalorder %s268, %s271
      %p280 = scmp.eq.s32.totalorder %s27, 3
      %p281 = por %p279, %p280
      %p282 = scmp.ne.s32.totalorder %s271, %s272
      %p283 = scmp.eq.s32.totalorder %s27, 0
      %p284 = por %p282, %p283
      %p285 = scmp.ne.s32.totalorder %s271, %s272
      %p286 = scmp.eq.s32.totalorder %s28, 3
      %p287 = por %p285, %p286
      %p289 = scmp.ne.s32.totalorder %s272, %s288
      %p290 = scmp.eq.s32.totalorder %s28, 0
      %p291 = por %p289, %p290
      %p292 = scmp.le.s32.totalorder 1, %s22
      %p293 = scmp.lt.s32.totalorder %s22, 5
      %p294 = pnand %p292, %p293
      %p295 = pneg %p294
      // Predicated region
      $region9: #{tpu_custom_call.1} parent=5 // pred_check
        _
      $region10: #{tpu_custom_call.1} parent=5 // pred_check_branch
        %297 = sbr.rel (%p294) target = $region12
      $region11: #{tpu_custom_call.1} parent=5 // pred_region
        %s298 = ssub.s32 %s22, 1
        // Predicated region
        $region13: #{tpu_custom_call.1} parent=11 // pred_check
          %p299 = pneg %p69
        $region14: #{tpu_custom_call.1} parent=11 // pred_check_branch
          %301 = sbr.rel (%p299) target = $region16
        $region15: #{tpu_custom_call.1} parent=11 // pred_region
          %303 = vsyncadd [#allocation4], 0
          %s305 = sshll.u32 %s1, 4
          %s306 = int_to_ptr.hbm [resolvable:$true] %s305
          %s307 = sshll.u32 [#allocation3], 4
          %s308 = int_to_ptr.vmem [resolvable:$true] %s307
          %310 = dma.hbm_to_vmem [thread:$0]  %s306, 16, %s308, [#allocation4]
        $region16: #{tpu_custom_call.1} parent=11 // pred_fallthru
          _
        // Predicated region
        $region17: #{tpu_custom_call.1} parent=11 // pred_check
          %p311 = pneg %p90
        $region18: #{tpu_custom_call.1} parent=11 // pred_check_branch
          %313 = sbr.rel (%p311) target = $region20
        $region19: #{tpu_custom_call.1} parent=11 // pred_region
          _
        $region20: #{tpu_custom_call.1} parent=11 // pred_fallthru
          _
        // Predicated region
        $region21: #{tpu_custom_call.1} parent=11 // pred_check
          %p314 = pneg %p111
        $region22: #{tpu_custom_call.1} parent=11 // pred_check_branch
          %316 = sbr.rel (%p314) target = $region24
        $region23: #{tpu_custom_call.1} parent=11 // pred_region
          _
        $region24: #{tpu_custom_call.1} parent=11 // pred_fallthru
          _
        // Predicated region
        $region25: #{tpu_custom_call.1} parent=11 // pred_check
          %p317 = pneg %p132
        $region26: #{tpu_custom_call.1} parent=11 // pred_check_branch
          %319 = sbr.rel (%p317) target = $region28
        $region27: #{tpu_custom_call.1} parent=11 // pred_region
          _
        $region28: #{tpu_custom_call.1} parent=11 // pred_fallthru
          _
        // Predicated region
        $region29: #{tpu_custom_call.1} parent=11 // pred_check
          %p320 = pneg %p153
        $region30: #{tpu_custom_call.1} parent=11 // pred_check_branch
          %322 = sbr.rel (%p320) target = $region32
        $region31: #{tpu_custom_call.1} parent=11 // pred_region
          _
        $region32: #{tpu_custom_call.1} parent=11 // pred_fallthru
          _
        // Predicated region
        $region33: #{tpu_custom_call.1} parent=11 // pred_check
          %p323 = pneg %p174
        $region34: #{tpu_custom_call.1} parent=11 // pred_check_branch
          %325 = sbr.rel (%p323) target = $region36
        $region35: #{tpu_custom_call.1} parent=11 // pred_region
          _
        $region36: #{tpu_custom_call.1} parent=11 // pred_fallthru
          _
        // Predicated region
        $region37: #{tpu_custom_call.1} parent=11 // pred_check
          %p326 = pneg %p195
        $region38: #{tpu_custom_call.1} parent=11 // pred_check_branch
          %328 = sbr.rel (%p326) target = $region40
        $region39: #{tpu_custom_call.1} parent=11 // pred_region
          %330 = vsyncadd [#allocation7], 0
          %s331 = sshll.u32 %s7, 4
          %s332 = int_to_ptr.hbm [resolvable:$true] %s331
          %s333 = sshll.u32 [#allocation6], 4
          %s334 = int_to_ptr.vmem [resolvable:$true] %s333
          %339 = dma.hbm_to_vmem [thread:$0]  %s332, 512, %s334, [#allocation7], 128, 128, 8
        $region40: #{tpu_custom_call.1} parent=11 // pred_fallthru
          _
        // Predicated region
        $region41: #{tpu_custom_call.1} parent=11 // pred_check
          %p340 = pneg %p216
        $region42: #{tpu_custom_call.1} parent=11 // pred_check_branch
          %342 = sbr.rel (%p340) target = $region44
        $region43: #{tpu_custom_call.1} parent=11 // pred_region
          _
        $region44: #{tpu_custom_call.1} parent=11 // pred_fallthru
          _
        // Predicated region
        $region45: #{tpu_custom_call.1} parent=11 // pred_check
          %p343 = pneg %p237
        $region46: #{tpu_custom_call.1} parent=11 // pred_check_branch
          %345 = sbr.rel (%p343) target = $region48
        $region47: #{tpu_custom_call.1} parent=11 // pred_region
          _
        $region48: #{tpu_custom_call.1} parent=11 // pred_fallthru
          _
        // Predicated region
        $region49: #{tpu_custom_call.1} parent=11 // pred_check
          %p346 = pneg %p258
        $region50: #{tpu_custom_call.1} parent=11 // pred_check_branch
          %348 = sbr.rel (%p346) target = $region52
        $region51: #{tpu_custom_call.1} parent=11 // pred_region
          _
        $region52: #{tpu_custom_call.1} parent=11 // pred_fallthru
          _
      $region12: #{tpu_custom_call.1} parent=5 // pred_fallthru
        _
      %p349 = scmp.lt.s32.totalorder %s22, 4
      // Predicated region
      $region53: #{tpu_custom_call.1} parent=5 // pred_check
        %p350 = pneg %p349
      $region54: #{tpu_custom_call.1} parent=5 // pred_check_branch
        %352 = sbr.rel (%p350) target = $region56
      $region55: #{tpu_custom_call.1} parent=5 // pred_region
        // Predicated region
        $region57: #{tpu_custom_call.1} parent=55 // pred_check
          %p353 = pneg %p42
        $region58: #{tpu_custom_call.1} parent=55 // pred_check_branch
          %355 = sbr.rel (%p353) target = $region60
        $region59: #{tpu_custom_call.1} parent=55 // pred_region
          %p356 = scmp.lt.s32.totalorder %s22, 3
          %s357 = scalar_select %p356, %s22, 3
          %s358 = smul.addr %s357, 8
          %s359 = scalar_lea.vmem %s0, %s358
        $region60: #{tpu_custom_call.1} parent=55 // pred_fallthru
          _
      $region56: #{tpu_custom_call.1} parent=5 // pred_fallthru
        _
      %p360 = scmp.le.s32.totalorder 1, %s22
      %p361 = scmp.lt.s32.totalorder %s22, 5
      %p362 = pnand %p360, %p361
      %p363 = pneg %p362
      // Predicated region
      $region61: #{tpu_custom_call.1} parent=5 // pred_check
        _
      $region62: #{tpu_custom_call.1} parent=5 // pred_check_branch
        %365 = sbr.rel (%p362) target = $region64
      $region63: #{tpu_custom_call.1} parent=5 // pred_region
        %s366 = ssub.s32 %s22, 1
        // Predicated region
        $region65: #{tpu_custom_call.1} parent=63 // pred_check
          %p367 = pneg %p69
        $region66: #{tpu_custom_call.1} parent=63 // pred_check_branch
          %369 = sbr.rel (%p367) target = $region68
        $region67: #{tpu_custom_call.1} parent=63 // pred_region
          %371 = dma.done [#allocation4], 16
        $region68: #{tpu_custom_call.1} parent=63 // pred_fallthru
          _
        // Predicated region
        $region69: #{tpu_custom_call.1} parent=63 // pred_check
          %p372 = pneg %p195
        $region70: #{tpu_custom_call.1} parent=63 // pred_check_branch
          %374 = sbr.rel (%p372) target = $region72
        $region71: #{tpu_custom_call.1} parent=63 // pred_region
          %376 = dma.done [#allocation7], 512
        $region72: #{tpu_custom_call.1} parent=63 // pred_fallthru
          _
        %p377 = scmp.lt.s32.totalorder %s27, 3
        %s378 = scalar_select %p377, %s27, 3
        %s379 = smul.addr %s378, 8
        %s380 = scalar_lea.vmem %s0, %s379
        %p381 = pneg %p48
        %p382 = pneg %p45
        %p383 = pneg %p69
        %p384 = pneg %p66
        %p385 = pneg %p90
        %p386 = pneg %p87
        %p387 = pneg %p111
        %p388 = pneg %p108
        %p389 = pneg %p132
        %p390 = pneg %p129
        %p391 = pneg %p153
        %p392 = pneg %p150
        %p393 = pneg %p174
        %p394 = pneg %p171
        %p395 = pneg %p195
        %p396 = pneg %p192
        %p397 = pneg %p216
        %p398 = pneg %p213
        %p399 = pneg %p237
        %p400 = pneg %p234
        %p401 = pneg %p258
        %p402 = pneg %p255
        %p403 = pneg %p284
        %p404 = pneg %p281
        %s405 = sand.u32 %s271, 1
        %s406 = scalar_lea.sflag [#allocation5], %s405
        %s407 = sand.u32 %s271, 1
        %s408 = smul.addr %s407, 8
        %s409 = scalar_lea.vmem [#allocation8], %s408
        %p410 = scmp.lt.s32.totalorder %s27, 3
        %s411 = scalar_select %p410, %s27, 3
        %s412 = smul.addr %s411, 8
        %s413 = scalar_lea.vmem %s0, %s412
        %v414 = vld [vmem:[%s413] sm:$0xff]
        %v415 = vld [vmem:[#allocation3] sm:$0x1]
        %v416 = vld [vmem:[%s2] sm:$0x1]
        %vm417 = vcmask 261120
        %v418 = vsel %vm417, %v414, 0.0
        %419 = vadd.xlane.f32.xlu0 %v418
        %v420 = vpop.xlane.xlu0 %419
        %v421 = vrcp.pop 32.0
        %v422 = vmul.f32 32.0, %v421
        %v423 = vsub.f32 1.0, %v422
        %v424 = vmul.f32 %v421, %v423
        %v425 = vadd.f32 %v421, %v424
        %vm426 = vweird.f32 %v421
        %v427 = vsel %vm426, %v421, %v425
        %v428 = vmul.f32 %v420, %v427
        %v429 = vsub.f32 %v414, %v428
        %v430 = vmul.f32 %v429, %v429
        %v431 = vsel %vm417, %v430, 0.0
        %432 = vadd.xlane.f32.xlu0 %v431
        %v433 = vpop.xlane.xlu0 %432
        %v434 = vmul.f32 %v433, %v427
        %v435 = vadd.f32 %v434, 1e-05
        %v436 = vrsqrt.pop %v435
        %v437 = vmul.f32 %v436, %v435
        %v438 = vmul.f32 %v437, %v436
        %v439 = vmul.f32 0.5, %v438
        %v440 = vsub.f32 1.5, %v439
        %v441 = vmul.f32 %v436, %v440
        %vm442 = vweird.f32 %v435
        %vm443 = vweird.f32 %v436
        %vm444 = vmor %vm442, %vm443
        %v445 = vsel %vm444, %v436, %v441
        %v446 = vmul.f32 %v429, %v445
        %v448 = vperm.slane %v415, 0
        %v450 = vmul.f32 %v446, %v448
        %v452 = vperm.slane %v416, 0
        %v454 = vadd.f32 %v450, %v452
        %v455 = vld [vmem:[%s3] sm:$0xff]
        %v456 = vld [vmem:[%s3 + $0x8] sm:$0xff]
        %v457 = vld [vmem:[%s3 + $0x10] sm:$0xff]
        %v458 = vld [vmem:[%s3 + $0x18] sm:$0xff]
        %v459 = vld [vmem:[%s4] sm:$0x1]
        %v461 = vperm.slane %v459, 0
        %v464 = vsel %vm417, %v454, 0
        %466 = vmatpush.msra.mxu0 0.0
        %467 = vmatpush.msra.mxu0 0.0
        %468 = vmatpush.msra.mxu0 0.0
        %469 = vmatpush.msra.mxu0 0.0
        %470 = vmatpush.msra.mxu0 0.0
        %471 = vmatpush.msra.mxu0 0.0
        %472 = vmatpush.msra.mxu0 0.0
        %473 = vmatpush.msra.mxu0 0.0
        %474 = vmatpush.msra.mxu0 0.0
        %475 = vmatpush.msra.mxu0 0.0
        %476 = vmatpush.msra.mxu0 0.0
        %477 = vmatpush.msra.mxu0 0.0
        %478 = vmatpush.msra.mxu0 %v458
        %479 = vmatpush.msra.mxu0 %v457
        %480 = vmatpush.msra.mxu0 %v456
        %481 = vmatpush.msra.mxu0 %v455
        %482 = vmatmul.f32.gmra.mxu0 %v464
        %v483 = vpop.f32.mrf.mxu0
        %v484 = vadd.f32 %v461, %v483
        %485 = vdwg.mxu0
        %487 = vrot.lane.b32.xlu0 %v484, 96
        %v488 = vpop.permute.xlu0 %487
        %vm489 = vcmask 64512
        %v490 = vsel %vm489, %v484, 0
        %v492 = vsel %vm489, %v488, 0
        %494 = vmatpush.xpose.msra.mxu0 0.0
        %495 = vmatpush.xpose.msra.mxu0 0.0
        %496 = vmatpush.xpose.msra.mxu0 0.0
        %497 = vmatpush.xpose.msra.mxu0 0.0
        %498 = vmatpush.xpose.msra.mxu0 0.0
        %499 = vmatpush.xpose.msra.mxu0 0.0
        %500 = vmatpush.xpose.msra.mxu0 0.0
        %501 = vmatpush.xpose.msra.mxu0 0.0
        %502 = vmatpush.xpose.msra.mxu0 0.0
        %503 = vmatpush.xpose.msra.mxu0 0.0
        %504 = vmatpush.xpose.msra.mxu0 0.0
        %505 = vmatpush.xpose.msra.mxu0 0.0
        %506 = vmatpush.xpose.msra.mxu0 0.0
        %507 = vmatpush.xpose.msra.mxu0 0.0
        %508 = vmatpush.xpose.msra.mxu0 0.0
        %509 = vmatpush.xpose.msra.mxu0 %v492
        %510 = vmatmul.f32.gmra.mxu0 %v490
        %v511 = vpop.f32.mrf.mxu0
        %v512 = vadd.f32 0.0, %v511
        %513 = vdwg.mxu0
        %v514 = vsel %vm489, %v512, -inf
        %515 = vmax.xlane.f32.xlu0 %v514
        %v516 = vpop.xlane.xlu0 %515
        %v517 = vsub.f32 %v512, %v516
        %v518 = vmul.f32 %v517, 1.442695
        %v519 = vpow.pop %v518
        %v520 = vsel %vm489, %v519, 0.0
        %521 = vadd.xlane.f32.xlu0 %v520
        %v522 = vpop.xlane.xlu0 %521
        %v523 = vrcp.pop %v522
        %v524 = vmul.f32 %v522, %v523
        %v525 = vsub.f32 1.0, %v524
        %v526 = vmul.f32 %v523, %v525
        %v527 = vadd.f32 %v523, %v526
        %vm528 = vweird.f32 %v522
        %vm529 = vweird.f32 %v523
        %vm530 = vmor %vm528, %vm529
        %v531 = vsel %vm530, %v523, %v527
        %v532 = vand.u32 2147483647, %v522
        %vm533 = vcmp.eq.f32.partialorder %v532, 8.507059e+37
        %v534 = vand.u32 %v522, 2147483648
        %v535 = vor.u32 1.1754944e-38, %v534
        %v536 = vsel %vm533, %v535, %v531
        %v537 = vmul.f32 %v519, %v536
        %538 = vrot.lane.b32.xlu0 %v484, 64
        %v539 = vpop.permute.xlu0 %538
        %v542 = vsel %vm489, %v537, 0
        %544 = vmatpush.msra.mxu0 0.0
        %545 = vmatpush.msra.mxu0 0.0
        %546 = vmatpush.msra.mxu0 0.0
        %547 = vmatpush.msra.mxu0 0.0
        %548 = vmatpush.msra.mxu0 0.0
        %549 = vmatpush.msra.mxu0 0.0
        %550 = vmatpush.msra.mxu0 0.0
        %551 = vmatpush.msra.mxu0 0.0
        %552 = vmatpush.msra.mxu0 0.0
        %553 = vmatpush.msra.mxu0 0.0
        %554 = vmatpush.msra.mxu0 0.0
        %555 = vmatpush.msra.mxu0 0.0
        %556 = vmatpush.msra.mxu0 0.0
        %557 = vmatpush.msra.mxu0 0.0
        %558 = vmatpush.msra.mxu0 0.0
        %559 = vmatpush.msra.mxu0 %v539
        %560 = vmatmul.f32.gmra.mxu0 %v542
        %v561 = vpop.f32.mrf.mxu0
        %v562 = vadd.f32 0.0, %v561
        %563 = vdwg.mxu0
        %564 = vst.msk [vmem:[#allocation2] sm:$0xff] %vm489, %v562
        %565 = vrot.lane.b32.xlu0 %v484, 120
        %v566 = vpop.permute.xlu0 %565
        %567 = vrot.lane.b32.xlu0 %v484, 88
        %v568 = vpop.permute.xlu0 %567
        %v569 = vsel %vm489, %v566, 0
        %v571 = vsel %vm489, %v568, 0
        %573 = vmatpush.xpose.msra.mxu0 0.0
        %574 = vmatpush.xpose.msra.mxu0 0.0
        %575 = vmatpush.xpose.msra.mxu0 0.0
        %576 = vmatpush.xpose.msra.mxu0 0.0
        %577 = vmatpush.xpose.msra.mxu0 0.0
        %578 = vmatpush.xpose.msra.mxu0 0.0
        %579 = vmatpush.xpose.msra.mxu0 0.0
        %580 = vmatpush.xpose.msra.mxu0 0.0
        %581 = vmatpush.xpose.msra.mxu0 0.0
        %582 = vmatpush.xpose.msra.mxu0 0.0
        %583 = vmatpush.xpose.msra.mxu0 0.0
        %584 = vmatpush.xpose.msra.mxu0 0.0
        %585 = vmatpush.xpose.msra.mxu0 0.0
        %586 = vmatpush.xpose.msra.mxu0 0.0
        %587 = vmatpush.xpose.msra.mxu0 0.0
        %588 = vmatpush.xpose.msra.mxu0 %v571
        %589 = vmatmul.f32.gmra.mxu0 %v569
        %v590 = vpop.f32.mrf.mxu0
        %v591 = vadd.f32 0.0, %v590
        %592 = vdwg.mxu0
        %v593 = vsel %vm489, %v591, -inf
        %594 = vmax.xlane.f32.xlu0 %v593
        %v595 = vpop.xlane.xlu0 %594
        %v596 = vsub.f32 %v591, %v595
        %v597 = vmul.f32 %v596, 1.442695
        %v598 = vpow.pop %v597
        %v599 = vsel %vm489, %v598, 0.0
        %600 = vadd.xlane.f32.xlu0 %v599
        %v601 = vpop.xlane.xlu0 %600
        %v602 = vrcp.pop %v601
        %v603 = vmul.f32 %v601, %v602
        %v604 = vsub.f32 1.0, %v603
        %v605 = vmul.f32 %v602, %v604
        %v606 = vadd.f32 %v602, %v605
        %vm607 = vweird.f32 %v601
        %vm608 = vweird.f32 %v602
        %vm609 = vmor %vm607, %vm608
        %v610 = vsel %vm609, %v602, %v606
        %v611 = vand.u32 2147483647, %v601
        %vm612 = vcmp.eq.f32.partialorder %v611, 8.507059e+37
        %v613 = vand.u32 %v601, 2147483648
        %v614 = vor.u32 1.1754944e-38, %v613
        %v615 = vsel %vm612, %v614, %v610
        %v616 = vmul.f32 %v598, %v615
        %617 = vrot.lane.b32.xlu0 %v484, 56
        %v618 = vpop.permute.xlu0 %617
        %v621 = vsel %vm489, %v616, 0
        %623 = vmatpush.msra.mxu0 0.0
        %624 = vmatpush.msra.mxu0 0.0
        %625 = vmatpush.msra.mxu0 0.0
        %626 = vmatpush.msra.mxu0 0.0
        %627 = vmatpush.msra.mxu0 0.0
        %628 = vmatpush.msra.mxu0 0.0
        %629 = vmatpush.msra.mxu0 0.0
        %630 = vmatpush.msra.mxu0 0.0
        %631 = vmatpush.msra.mxu0 0.0
        %632 = vmatpush.msra.mxu0 0.0
        %633 = vmatpush.msra.mxu0 0.0
        %634 = vmatpush.msra.mxu0 0.0
        %635 = vmatpush.msra.mxu0 0.0
        %636 = vmatpush.msra.mxu0 0.0
        %637 = vmatpush.msra.mxu0 0.0
        %638 = vmatpush.msra.mxu0 %v618
        %639 = vmatmul.f32.gmra.mxu0 %v621
        %v640 = vpop.f32.mrf.mxu0
        %v641 = vadd.f32 0.0, %v640
        %642 = vdwg.mxu0
        %644 = vrot.lane.b32.xlu0 %v641, 8
        %v645 = vpop.permute.xlu0 %644
        %vm647 = vcmask 130112
        %648 = vst.msk [vmem:[#allocation2] sm:$0xff] %vm647, %v645
        %649 = vrot.lane.b32.xlu0 %v484, 112
        %v650 = vpop.permute.xlu0 %649
        %651 = vrot.lane.b32.xlu0 %v484, 80
        %v652 = vpop.permute.xlu0 %651
        %v653 = vsel %vm489, %v650, 0
        %v655 = vsel %vm489, %v652, 0
        %657 = vmatpush.xpose.msra.mxu0 0.0
        %658 = vmatpush.xpose.msra.mxu0 0.0
        %659 = vmatpush.xpose.msra.mxu0 0.0
        %660 = vmatpush.xpose.msra.mxu0 0.0
        %661 = vmatpush.xpose.msra.mxu0 0.0
        %662 = vmatpush.xpose.msra.mxu0 0.0
        %663 = vmatpush.xpose.msra.mxu0 0.0
        %664 = vmatpush.xpose.msra.mxu0 0.0
        %665 = vmatpush.xpose.msra.mxu0 0.0
        %666 = vmatpush.xpose.msra.mxu0 0.0
        %667 = vmatpush.xpose.msra.mxu0 0.0
        %668 = vmatpush.xpose.msra.mxu0 0.0
        %669 = vmatpush.xpose.msra.mxu0 0.0
        %670 = vmatpush.xpose.msra.mxu0 0.0
        %671 = vmatpush.xpose.msra.mxu0 0.0
        %672 = vmatpush.xpose.msra.mxu0 %v655
        %673 = vmatmul.f32.gmra.mxu0 %v653
        %v674 = vpop.f32.mrf.mxu0
        %v675 = vadd.f32 0.0, %v674
        %676 = vdwg.mxu0
        %v677 = vsel %vm489, %v675, -inf
        %678 = vmax.xlane.f32.xlu0 %v677
        %v679 = vpop.xlane.xlu0 %678
        %v680 = vsub.f32 %v675, %v679
        %v681 = vmul.f32 %v680, 1.442695
        %v682 = vpow.pop %v681
        %v683 = vsel %vm489, %v682, 0.0
        %684 = vadd.xlane.f32.xlu0 %v683
        %v685 = vpop.xlane.xlu0 %684
        %v686 = vrcp.pop %v685
        %v687 = vmul.f32 %v685, %v686
        %v688 = vsub.f32 1.0, %v687
        %v689 = vmul.f32 %v686, %v688
        %v690 = vadd.f32 %v686, %v689
        %vm691 = vweird.f32 %v685
        %vm692 = vweird.f32 %v686
        %vm693 = vmor %vm691, %vm692
        %v694 = vsel %vm693, %v686, %v690
        %v695 = vand.u32 2147483647, %v685
        %vm696 = vcmp.eq.f32.partialorder %v695, 8.507059e+37
        %v697 = vand.u32 %v685, 2147483648
        %v698 = vor.u32 1.1754944e-38, %v697
        %v699 = vsel %vm696, %v698, %v694
        %v700 = vmul.f32 %v682, %v699
        %701 = vrot.lane.b32.xlu0 %v484, 48
        %v702 = vpop.permute.xlu0 %701
        %v705 = vsel %vm489, %v700, 0
        %707 = vmatpush.msra.mxu0 0.0
        %708 = vmatpush.msra.mxu0 0.0
        %709 = vmatpush.msra.mxu0 0.0
        %710 = vmatpush.msra.mxu0 0.0
        %711 = vmatpush.msra.mxu0 0.0
        %712 = vmatpush.msra.mxu0 0.0
        %713 = vmatpush.msra.mxu0 0.0
        %714 = vmatpush.msra.mxu0 0.0
        %715 = vmatpush.msra.mxu0 0.0
        %716 = vmatpush.msra.mxu0 0.0
        %717 = vmatpush.msra.mxu0 0.0
        %718 = vmatpush.msra.mxu0 0.0
        %719 = vmatpush.msra.mxu0 0.0
        %720 = vmatpush.msra.mxu0 0.0
        %721 = vmatpush.msra.mxu0 0.0
        %722 = vmatpush.msra.mxu0 %v702
        %723 = vmatmul.f32.gmra.mxu0 %v705
        %v724 = vpop.f32.mrf.mxu0
        %v725 = vadd.f32 0.0, %v724
        %726 = vdwg.mxu0
        %728 = vrot.lane.b32.xlu0 %v725, 16
        %v729 = vpop.permute.xlu0 %728
        %vm731 = vcmask 195712
        %732 = vst.msk [vmem:[#allocation2] sm:$0xff] %vm731, %v729
        %733 = vrot.lane.b32.xlu0 %v484, 104
        %v734 = vpop.permute.xlu0 %733
        %735 = vrot.lane.b32.xlu0 %v484, 72
        %v736 = vpop.permute.xlu0 %735
        %v737 = vsel %vm489, %v734, 0
        %v739 = vsel %vm489, %v736, 0
        %741 = vmatpush.xpose.msra.mxu0 0.0
        %742 = vmatpush.xpose.msra.mxu0 0.0
        %743 = vmatpush.xpose.msra.mxu0 0.0
        %744 = vmatpush.xpose.msra.mxu0 0.0
        %745 = vmatpush.xpose.msra.mxu0 0.0
        %746 = vmatpush.xpose.msra.mxu0 0.0
        %747 = vmatpush.xpose.msra.mxu0 0.0
        %748 = vmatpush.xpose.msra.mxu0 0.0
        %749 = vmatpush.xpose.msra.mxu0 0.0
        %750 = vmatpush.xpose.msra.mxu0 0.0
        %751 = vmatpush.xpose.msra.mxu0 0.0
        %752 = vmatpush.xpose.msra.mxu0 0.0
        %753 = vmatpush.xpose.msra.mxu0 0.0
        %754 = vmatpush.xpose.msra.mxu0 0.0
        %755 = vmatpush.xpose.msra.mxu0 0.0
        %756 = vmatpush.xpose.msra.mxu0 %v739
        %757 = vmatmul.f32.gmra.mxu0 %v737
        %v758 = vpop.f32.mrf.mxu0
        %v759 = vadd.f32 0.0, %v758
        %760 = vdwg.mxu0
        %v761 = vsel %vm489, %v759, -inf
        %762 = vmax.xlane.f32.xlu0 %v761
        %v763 = vpop.xlane.xlu0 %762
        %v764 = vsub.f32 %v759, %v763
        %v765 = vmul.f32 %v764, 1.442695
        %v766 = vpow.pop %v765
        %v767 = vsel %vm489, %v766, 0.0
        %768 = vadd.xlane.f32.xlu0 %v767
        %v769 = vpop.xlane.xlu0 %768
        %v770 = vrcp.pop %v769
        %v771 = vmul.f32 %v769, %v770
        %v772 = vsub.f32 1.0, %v771
        %v773 = vmul.f32 %v770, %v772
        %v774 = vadd.f32 %v770, %v773
        %vm775 = vweird.f32 %v769
        %vm776 = vweird.f32 %v770
        %vm777 = vmor %vm775, %vm776
        %v778 = vsel %vm777, %v770, %v774
        %v779 = vand.u32 2147483647, %v769
        %vm780 = vcmp.eq.f32.partialorder %v779, 8.507059e+37
        %v781 = vand.u32 %v769, 2147483648
        %v782 = vor.u32 1.1754944e-38, %v781
        %v783 = vsel %vm780, %v782, %v778
        %v784 = vmul.f32 %v766, %v783
        %785 = vrot.lane.b32.xlu0 %v484, 40
        %v786 = vpop.permute.xlu0 %785
        %v789 = vsel %vm489, %v784, 0
        %791 = vmatpush.msra.mxu0 0.0
        %792 = vmatpush.msra.mxu0 0.0
        %793 = vmatpush.msra.mxu0 0.0
        %794 = vmatpush.msra.mxu0 0.0
        %795 = vmatpush.msra.mxu0 0.0
        %796 = vmatpush.msra.mxu0 0.0
        %797 = vmatpush.msra.mxu0 0.0
        %798 = vmatpush.msra.mxu0 0.0
        %799 = vmatpush.msra.mxu0 0.0
        %800 = vmatpush.msra.mxu0 0.0
        %801 = vmatpush.msra.mxu0 0.0
        %802 = vmatpush.msra.mxu0 0.0
        %803 = vmatpush.msra.mxu0 0.0
        %804 = vmatpush.msra.mxu0 0.0
        %805 = vmatpush.msra.mxu0 0.0
        %806 = vmatpush.msra.mxu0 %v786
        %807 = vmatmul.f32.gmra.mxu0 %v789
        %v808 = vpop.f32.mrf.mxu0
        %v809 = vadd.f32 0.0, %v808
        %810 = vdwg.mxu0
        %812 = vrot.lane.b32.xlu0 %v809, 24
        %v813 = vpop.permute.xlu0 %812
        %vm815 = vcmask 261312
        %816 = vst.msk [vmem:[#allocation2] sm:$0xff] %vm815, %v813
        %v817 = vld [vmem:[#allocation2] sm:$0xff]
        %v818 = vld [vmem:[%s5] sm:$0xff]
        %v819 = vld [vmem:[%s5 + $0x8] sm:$0xff]
        %v820 = vld [vmem:[%s5 + $0x10] sm:$0xff]
        %v821 = vld [vmem:[%s5 + $0x18] sm:$0xff]
        %v822 = vld [vmem:[%s6] sm:$0x1]
        %v824 = vperm.slane %v822, 0
        %v827 = vsel %vm417, %v817, 0
        %829 = vmatpush.msra.mxu0 0.0
        %830 = vmatpush.msra.mxu0 0.0
        %831 = vmatpush.msra.mxu0 0.0
        %832 = vmatpush.msra.mxu0 0.0
        %833 = vmatpush.msra.mxu0 0.0
        %834 = vmatpush.msra.mxu0 0.0
        %835 = vmatpush.msra.mxu0 0.0
        %836 = vmatpush.msra.mxu0 0.0
        %837 = vmatpush.msra.mxu0 0.0
        %838 = vmatpush.msra.mxu0 0.0
        %839 = vmatpush.msra.mxu0 0.0
        %840 = vmatpush.msra.mxu0 0.0
        %841 = vmatpush.msra.mxu0 %v821
        %842 = vmatpush.msra.mxu0 %v820
        %843 = vmatpush.msra.mxu0 %v819
        %844 = vmatpush.msra.mxu0 %v818
        %845 = vmatmul.f32.gmra.mxu0 %v827
        %v846 = vpop.f32.mrf.mxu0
        %v847 = vadd.f32 %v824, %v846
        %848 = vdwg.mxu0
        %v849 = vadd.f32 %v847, %v414
        %v850 = vsel %vm417, %v849, 0.0
        %851 = vadd.xlane.f32.xlu0 %v850
        %v852 = vpop.xlane.xlu0 %851
        %v853 = vmul.f32 %v852, %v427
        %v854 = vsub.f32 %v849, %v853
        %v855 = vmul.f32 %v854, %v854
        %v856 = vsel %vm417, %v855, 0.0
        %857 = vadd.xlane.f32.xlu0 %v856
        %v858 = vpop.xlane.xlu0 %857
        %v859 = vmul.f32 %v858, %v427
        %v860 = vadd.f32 %v859, 1e-05
        %v861 = vrsqrt.pop %v860
        %v862 = vmul.f32 %v861, %v860
        %v863 = vmul.f32 %v862, %v861
        %v864 = vmul.f32 0.5, %v863
        %v865 = vsub.f32 1.5, %v864
        %v866 = vmul.f32 %v861, %v865
        %vm867 = vweird.f32 %v860
        %vm868 = vweird.f32 %v861
        %vm869 = vmor %vm867, %vm868
        %v870 = vsel %vm869, %v861, %v866
        %v871 = vmul.f32 %v854, %v870
        %v872 = vmul.f32 %v871, %v448
        %v873 = vadd.f32 %v872, %v452
        %v874 = vld [vmem:[#allocation6] sm:$0xff]
        %v875 = vld [vmem:[#allocation6 + $0x8] sm:$0xff]
        %v876 = vld [vmem:[#allocation6 + $0x10] sm:$0xff]
        %v877 = vld [vmem:[#allocation6 + $0x18] sm:$0xff]
        %v878 = vld [vmem:[%s8] sm:$0x1]
        %v880 = vperm.slane %v878, 0
        %v883 = vsel %vm417, %v873, 0
        %885 = vmatpush.msra.mxu0 0.0
        %886 = vmatpush.msra.mxu0 0.0
        %887 = vmatpush.msra.mxu0 0.0
        %888 = vmatpush.msra.mxu0 0.0
        %889 = vmatpush.msra.mxu0 0.0
        %890 = vmatpush.msra.mxu0 0.0
        %891 = vmatpush.msra.mxu0 0.0
        %892 = vmatpush.msra.mxu0 0.0
        %893 = vmatpush.msra.mxu0 0.0
        %894 = vmatpush.msra.mxu0 0.0
        %895 = vmatpush.msra.mxu0 0.0
        %896 = vmatpush.msra.mxu0 0.0
        %897 = vmatpush.msra.mxu0 %v877
        %898 = vmatpush.msra.mxu0 %v876
        %899 = vmatpush.msra.mxu0 %v875
        %900 = vmatpush.msra.mxu0 %v874
        %901 = vmatmul.f32.gmra.mxu0 %v883
        %v902 = vpop.f32.mrf.mxu0
        %v903 = vadd.f32 %v880, %v902
        %904 = vdwg.mxu0
        %v905 = vmul.f32 %v903, 0.5
        %v906 = vmul.f32 %v903, 0.044715
        %v907 = vmul.f32 %v906, %v903
        %v908 = vmul.f32 %v907, %v903
        %v909 = vadd.f32 %v903, %v908
        %v910 = vmul.f32 %v909, 0.7978846
        %v911 = vtanh.pop %v910
        %v912 = vadd.f32 %v911, 1.0
        %v913 = vmul.f32 %v905, %v912
        %v914 = vld [vmem:[%s9] sm:$0xff]
        %v915 = vld [vmem:[%s9 + $0x8] sm:$0xff]
        %v916 = vld [vmem:[%s9 + $0x10] sm:$0xff]
        %v917 = vld [vmem:[%s9 + $0x18] sm:$0xff]
        %v918 = vld [vmem:[%s9 + $0x20] sm:$0xff]
        %v919 = vld [vmem:[%s9 + $0x28] sm:$0xff]
        %v920 = vld [vmem:[%s9 + $0x30] sm:$0xff]
        %v921 = vld [vmem:[%s9 + $0x38] sm:$0xff]
        %v922 = vld [vmem:[%s10] sm:$0x1]
        %v924 = vperm.slane %v922, 0
        %vm926 = vcmask 523264
        %v928 = vsel %vm926, %v913, 0
        %930 = vmatpush.msra.mxu0 0.0
        %931 = vmatpush.msra.mxu0 0.0
        %932 = vmatpush.msra.mxu0 0.0
        %933 = vmatpush.msra.mxu0 0.0
        %934 = vmatpush.msra.mxu0 0.0
        %935 = vmatpush.msra.mxu0 0.0
        %936 = vmatpush.msra.mxu0 0.0
        %937 = vmatpush.msra.mxu0 0.0
        %938 = vmatpush.msra.mxu0 %v921
        %939 = vmatpush.msra.mxu0 %v920
        %940 = vmatpush.msra.mxu0 %v919
        %941 = vmatpush.msra.mxu0 %v918
        %942 = vmatpush.msra.mxu0 %v917
        %943 = vmatpush.msra.mxu0 %v916
        %944 = vmatpush.msra.mxu0 %v915
        %945 = vmatpush.msra.mxu0 %v914
        %946 = vmatmul.f32.gmra.mxu0 %v928
        %v947 = vpop.f32.mrf.mxu0
        %v948 = vadd.f32 %v924, %v947
        %949 = vdwg.mxu0
        %v950 = vadd.f32 %v948, %v849
        %951 = vst.msk [vmem:[%s409] sm:$0xff] %vm417, %v950
        %s952 = sand.u32 %s271, 1
        %s953 = scalar_lea.sflag [#allocation5], %s952
        %s954 = sand.u32 %s271, 1
        %s955 = smul.addr %s954, 8
        %s956 = scalar_lea.vmem [#allocation8], %s955
        // Predicated region
        $region73: #{tpu_custom_call.1} parent=63 // pred_check
          %p957 = pneg %p281
        $region74: #{tpu_custom_call.1} parent=63 // pred_check_branch
          %959 = sbr.rel (%p957) target = $region76
        $region75: #{tpu_custom_call.1} parent=63 // pred_region
          %961 = vsyncadd %s953, 0
          %s962 = smul.addr %s27, 8
          %s963 = scalar_lea.hbm %s11, %s962
          %s965 = sshll.u32 %s956, 4
          %s966 = int_to_ptr.vmem [resolvable:$true] %s965
          %s967 = sshll.u32 %s963, 4
          %s968 = int_to_ptr.hbm [resolvable:$true] %s967
          %970 = dma.vmem_to_hbm [thread:$0]  %s966, 128, %s968, %s953
        $region76: #{tpu_custom_call.1} parent=63 // pred_fallthru
          _
      $region64: #{tpu_custom_call.1} parent=5 // pred_fallthru
        _
      %p971 = scmp.le.s32.totalorder 2, %s22
      // Predicated region
      $region77: #{tpu_custom_call.1} parent=5 // pred_check
        %p972 = pneg %p971
      $region78: #{tpu_custom_call.1} parent=5 // pred_check_branch
        %974 = sbr.rel (%p972) target = $region80
      $region79: #{tpu_custom_call.1} parent=5 // pred_region
        %s975 = ssub.s32 %s22, 2
        // Predicated region
        $region81: #{tpu_custom_call.1} parent=79 // pred_check
          %p976 = pneg %p287
        $region82: #{tpu_custom_call.1} parent=79 // pred_check_branch
          %978 = sbr.rel (%p976) target = $region84
        $region83: #{tpu_custom_call.1} parent=79 // pred_region
          %s979 = sand.u32 %s272, 1
          %s980 = scalar_lea.sflag [#allocation5], %s979
          %s981 = sand.u32 %s272, 1
          %s982 = smul.addr %s981, 8
          %s983 = scalar_lea.vmem [#allocation8], %s982
          %985 = dma.done %s980, 128
        $region84: #{tpu_custom_call.1} parent=79 // pred_fallthru
          _
      $region80: #{tpu_custom_call.1} parent=5 // pred_fallthru
        _
    $region6: #{tpu_custom_call.1} parent=1 // loop_footer
      %s26 = sadd.s32 1, %s22
    $region7: #{tpu_custom_call.1} parent=1 // loop_footer_branch
      %21 = sbr.rel target = $region3
    $region8: #{tpu_custom_call.1} parent=1 // loop_exit
      _
    %986 = vsyncpa [#allocation4], 1
    %s987 = scalar_lea.sflag [#allocation4], 1
    %988 = vsyncpa %s987, 1
    %989 = vsyncpa [#allocation7], 1
    %990 = vsyncpa [#allocation5], 1
    %s991 = scalar_lea.sflag [#allocation5], 1
    %992 = vsyncpa %s991, 1

// kernel: tpu_custom_call.1
$region0: #{tpu_custom_call.1}
  #allocation0 [shape = 'u32[]', space=smem, size = 0x4, offset = 0x4, fixed_abs, tag = 'smem constant byte address 0x4 - core index']
  #allocation1 [shape = 'u32[72,128]{1,0:T(1,128)}', space=vmem, size = 0x9000, scoped, tag = 'internal scratch']
  #allocation2 [shape = 'f32[8,32]{1,0:T(8,128)}', space=vmem, size = 0x1000, scoped, tag = 'scratch operand']
  %s0 = inlined_call_operand.vmem [shape: f32[4,8,32], index: 0, kind: input, shape index: {}]
  %s1 = inlined_call_operand.hbm [shape: f32[1,32], index: 1, kind: input, shape index: {}]
  %s2 = inlined_call_operand.vmem [shape: f32[1,32], index: 2, kind: input, shape index: {}]
  %s3 = inlined_call_operand.vmem [shape: f32[32,96], index: 3, kind: input, shape index: {}]
  %s4 = inlined_call_operand.vmem [shape: f32[1,96], index: 4, kind: input, shape index: {}]
  %s5 = inlined_call_operand.vmem [shape: f32[32,32], index: 5, kind: input, shape index: {}]
  %s6 = inlined_call_operand.vmem [shape: f32[1,32], index: 6, kind: input, shape index: {}]
  %s7 = inlined_call_operand.hbm [shape: f32[32,64], index: 7, kind: input, shape index: {}]
  %s8 = inlined_call_operand.vmem [shape: f32[1,64], index: 8, kind: input, shape index: {}]
  %s9 = inlined_call_operand.vmem [shape: f32[64,32], index: 9, kind: input, shape index: {}]
  %s10 = inlined_call_operand.vmem [shape: f32[1,32], index: 10, kind: input, shape index: {}]
  %s11 = inlined_call_operand.hbm [shape: f32[4,8,32], index: 11, kind: output, shape index: {}]
  %s12 = sld [smem:[#allocation0]]
  $region85: #{tpu_custom_call.1} parent=0
    _
  %s14 = ssub.s32 1, %s12
  %s15 = scalar_select 0, %s14, %s12
  $region1: #{tpu_custom_call.1} parent=0
    #allocation3 [shape = 'u8[512]{0}', space=vmem, size = 0x400, scoped, tag = 'input window, operand 1, single buffered']
    #allocation4 [shape = 's32[2]{0}', space=sflag, size = 0x8, scoped, tag = 'scoped memory for tpu_custom_call.1']
    #allocation5 [shape = 's32[2]{0}', space=sflag, size = 0x8, scoped, tag = 'scoped memory for tpu_custom_call.1']
    #allocation6 [shape = 'u8[16384]{0}', space=vmem, size = 0x4000, scoped, tag = 'input window, operand 7, single buffered']
    #allocation7 [shape = 's32[1]{0}', space=sflag, size = 0x4, scoped, tag = 'scoped memory for tpu_custom_call.1']
    #allocation8 [shape = 'u8[8192]{0}', space=vmem, size = 0x2000, scoped, tag = 'output window, operand 0']
    %16 = vsyncpa [#allocation4], 0
    %17 = vsyncpa [#allocation7], 0
    %18 = vsyncpa [#allocation5], 0
    %s19 = scalar_lea.sflag [#allocation5], 1
    %20 = vsyncpa %s19, 0
    loop: start=0, step=1, limit=6
    $region2: #{tpu_custom_call.1} parent=1 // loop_pre_header
      _
    $region3: #{tpu_custom_call.1} parent=1 // loop_header
      %s22 = sphi 0, %s26
      %p23 = scmp.ge.s32.totalorder %s22, 6
      %s32 = sphi 0, %s34
      %s35 = sphi 0, %s32
      %s36 = sphi 0, %s35
      %s52 = sphi 0, %s36
      %s56 = sphi 0, %s56
      %s58 = sphi 0, %s56
      %s59 = sphi 0, %s58
      %s73 = sphi 0, %s59
      %s77 = sphi 0, %s77
      %s79 = sphi 0, %s77
      %s80 = sphi 0, %s79
      %s94 = sphi 0, %s80
      %s98 = sphi 0, %s98
      %s100 = sphi 0, %s98
      %s101 = sphi 0, %s100
      %s115 = sphi 0, %s101
      %s119 = sphi 0, %s119
      %s121 = sphi 0, %s119
      %s122 = sphi 0, %s121
      %s136 = sphi 0, %s122
      %s140 = sphi 0, %s140
      %s142 = sphi 0, %s140
      %s143 = sphi 0, %s142
      %s157 = sphi 0, %s143
      %s161 = sphi 0, %s161
      %s163 = sphi 0, %s161
      %s164 = sphi 0, %s163
      %s178 = sphi 0, %s164
      %s182 = sphi 0, %s182
      %s184 = sphi 0, %s182
      %s185 = sphi 0, %s184
      %s199 = sphi 0, %s185
      %s203 = sphi 0, %s203
      %s205 = sphi 0, %s203
      %s206 = sphi 0, %s205
      %s220 = sphi 0, %s206
      %s224 = sphi 0, %s224
      %s226 = sphi 0, %s224
      %s227 = sphi 0, %s226
      %s241 = sphi 0, %s227
      %s245 = sphi 0, %s245
      %s247 = sphi 0, %s245
      %s248 = sphi 0, %s247
      %s262 = sphi 0, %s248
      %s268 = sphi 0, %s270
      %s271 = sphi 0, %s268
      %s272 = sphi 0, %s271
      %s288 = sphi 0, %s272
    $region4: #{tpu_custom_call.1} parent=1 // loop_header_branch
      %25 = sbr.rel (%p23) target = $region8
    $region5: #{tpu_custom_call.1} parent=1 // loop_body
      %s27 = ssub.s32 %s22, 1
      %s28 = ssub.s32 %s22, 2
      %s29 = sadd.s32 %s22, 1
      %s30 = ssub.s32 %s22, %s29
      %p31 = scmp.eq.s32.totalorder %s30, 0
      %s33 = sadd.s32 %s32, 1
      %s34 = scalar_select %p31, %s32, %s33
      %p37 = pneg %p31
      %p38 = scmp.eq.s32.totalorder %s22, 3
      %p39 = por %p37, %p38
      %p40 = scmp.ne.s32.totalorder %s32, %s35
      %p41 = scmp.eq.s32.totalorder %s22, 0
      %p42 = por %p40, %p41
      %p43 = scmp.ne.s32.totalorder %s32, %s35
      %p44 = scmp.eq.s32.totalorder %s27, 3
      %p45 = por %p43, %p44
      %p46 = scmp.ne.s32.totalorder %s35, %s36
      %p47 = scmp.eq.s32.totalorder %s27, 0
      %p48 = por %p46, %p47
      %p49 = scmp.ne.s32.totalorder %s35, %s36
      %p50 = scmp.eq.s32.totalorder %s28, 3
      %p51 = por %p49, %p50
      %p53 = scmp.ne.s32.totalorder %s36, %s52
      %p54 = scmp.eq.s32.totalorder %s28, 0
      %p55 = por %p53, %p54
      %s57 = sadd.s32 %s56, 1
      %p60 = scmp.eq.s32.totalorder %s22, 3
      %p61 = scmp.ne.s32.totalorder %s56, %s58
      %p62 = scmp.eq.s32.totalorder %s22, 0
      %p63 = por %p61, %p62
      %p64 = scmp.ne.s32.totalorder %s56, %s58
      %p65 = scmp.eq.s32.totalorder %s27, 3
      %p66 = por %p64, %p65
      %p67 = scmp.ne.s32.totalorder %s58, %s59
      %p68 = scmp.eq.s32.totalorder %s27, 0
      %p69 = por %p67, %p68
      %p70 = scmp.ne.s32.totalorder %s58, %s59
      %p71 = scmp.eq.s32.totalorder %s28, 3
      %p72 = por %p70, %p71
      %p74 = scmp.ne.s32.totalorder %s59, %s73
      %p75 = scmp.eq.s32.totalorder %s28, 0
      %p76 = por %p74, %p75
      %s78 = sadd.s32 %s77, 1
      %p81 = scmp.eq.s32.totalorder %s22, 3
      %p82 = scmp.ne.s32.totalorder %s77, %s79
      %p83 = scmp.eq.s32.totalorder %s22, 0
      %p84 = por %p82, %p83
      %p85 = scmp.ne.s32.totalorder %s77, %s79
      %p86 = scmp.eq.s32.totalorder %s27, 3
      %p87 = por %p85, %p86
      %p88 = scmp.ne.s32.totalorder %s79, %s80
      %p89 = scmp.eq.s32.totalorder %s27, 0
      %p90 = por %p88, %p89
      %p91 = scmp.ne.s32.totalorder %s79, %s80
      %p92 = scmp.eq.s32.totalorder %s28, 3
      %p93 = por %p91, %p92
      %p95 = scmp.ne.s32.totalorder %s80, %s94
      %p96 = scmp.eq.s32.totalorder %s28, 0
      %p97 = por %p95, %p96
      %s99 = sadd.s32 %s98, 1
      %p102 = scmp.eq.s32.totalorder %s22, 3
      %p103 = scmp.ne.s32.totalorder %s98, %s100
      %p104 = scmp.eq.s32.totalorder %s22, 0
      %p105 = por %p103, %p104
      %p106 = scmp.ne.s32.totalorder %s98, %s100
      %p107 = scmp.eq.s32.totalorder %s27, 3
      %p108 = por %p106, %p107
      %p109 = scmp.ne.s32.totalorder %s100, %s101
      %p110 = scmp.eq.s32.totalorder %s27, 0
      %p111 = por %p109, %p110
      %p112 = scmp.ne.s32.totalorder %s100, %s101
      %p113 = scmp.eq.s32.totalorder %s28, 3
      %p114 = por %p112, %p113
      %p116 = scmp.ne.s32.totalorder %s101, %s115
      %p117 = scmp.eq.s32.totalorder %s28, 0
      %p118 = por %p116, %p117
      %s120 = sadd.s32 %s119, 1
      %p123 = scmp.eq.s32.totalorder %s22, 3
      %p124 = scmp.ne.s32.totalorder %s119, %s121
      %p125 = scmp.eq.s32.totalorder %s22, 0
      %p126 = por %p124, %p125
      %p127 = scmp.ne.s32.totalorder %s119, %s121
      %p128 = scmp.eq.s32.totalorder %s27, 3
      %p129 = por %p127, %p128
      %p130 = scmp.ne.s32.totalorder %s121, %s122
      %p131 = scmp.eq.s32.totalorder %s27, 0
      %p132 = por %p130, %p131
      %p133 = scmp.ne.s32.totalorder %s121, %s122
      %p134 = scmp.eq.s32.totalorder %s28, 3
      %p135 = por %p133, %p134
      %p137 = scmp.ne.s32.totalorder %s122, %s136
      %p138 = scmp.eq.s32.totalorder %s28, 0
      %p139 = por %p137, %p138
      %s141 = sadd.s32 %s140, 1
      %p144 = scmp.eq.s32.totalorder %s22, 3
      %p145 = scmp.ne.s32.totalorder %s140, %s142
      %p146 = scmp.eq.s32.totalorder %s22, 0
      %p147 = por %p145, %p146
      %p148 = scmp.ne.s32.totalorder %s140, %s142
      %p149 = scmp.eq.s32.totalorder %s27, 3
      %p150 = por %p148, %p149
      %p151 = scmp.ne.s32.totalorder %s142, %s143
      %p152 = scmp.eq.s32.totalorder %s27, 0
      %p153 = por %p151, %p152
      %p154 = scmp.ne.s32.totalorder %s142, %s143
      %p155 = scmp.eq.s32.totalorder %s28, 3
      %p156 = por %p154, %p155
      %p158 = scmp.ne.s32.totalorder %s143, %s157
      %p159 = scmp.eq.s32.totalorder %s28, 0
      %p160 = por %p158, %p159
      %s162 = sadd.s32 %s161, 1
      %p165 = scmp.eq.s32.totalorder %s22, 3
      %p166 = scmp.ne.s32.totalorder %s161, %s163
      %p167 = scmp.eq.s32.totalorder %s22, 0
      %p168 = por %p166, %p167
      %p169 = scmp.ne.s32.totalorder %s161, %s163
      %p170 = scmp.eq.s32.totalorder %s27, 3
      %p171 = por %p169, %p170
      %p172 = scmp.ne.s32.totalorder %s163, %s164
      %p173 = scmp.eq.s32.totalorder %s27, 0
      %p174 = por %p172, %p173
      %p175 = scmp.ne.s32.totalorder %s163, %s164
      %p176 = scmp.eq.s32.totalorder %s28, 3
      %p177 = por %p175, %p176
      %p179 = scmp.ne.s32.totalorder %s164, %s178
      %p180 = scmp.eq.s32.totalorder %s28, 0
      %p181 = por %p179, %p180
      %s183 = sadd.s32 %s182, 1
      %p186 = scmp.eq.s32.totalorder %s22, 3
      %p187 = scmp.ne.s32.totalorder %s182, %s184
      %p188 = scmp.eq.s32.totalorder %s22, 0
      %p189 = por %p187, %p188
      %p190 = scmp.ne.s32.totalorder %s182, %s184
      %p191 = scmp.eq.s32.totalorder %s27, 3
      %p192 = por %p190, %p191
      %p193 = scmp.ne.s32.totalorder %s184, %s185
      %p194 = scmp.eq.s32.totalorder %s27, 0
      %p195 = por %p193, %p194
      %p196 = scmp.ne.s32.totalorder %s184, %s185
      %p197 = scmp.eq.s32.totalorder %s28, 3
      %p198 = por %p196, %p197
      %p200 = scmp.ne.s32.totalorder %s185, %s199
      %p201 = scmp.eq.s32.totalorder %s28, 0
      %p202 = por %p200, %p201
      %s204 = sadd.s32 %s203, 1
      %p207 = scmp.eq.s32.totalorder %s22, 3
      %p208 = scmp.ne.s32.totalorder %s203, %s205
      %p209 = scmp.eq.s32.totalorder %s22, 0
      %p210 = por %p208, %p209
      %p211 = scmp.ne.s32.totalorder %s203, %s205
      %p212 = scmp.eq.s32.totalorder %s27, 3
      %p213 = por %p211, %p212
      %p214 = scmp.ne.s32.totalorder %s205, %s206
      %p215 = scmp.eq.s32.totalorder %s27, 0
      %p216 = por %p214, %p215
      %p217 = scmp.ne.s32.totalorder %s205, %s206
      %p218 = scmp.eq.s32.totalorder %s28, 3
      %p219 = por %p217, %p218
      %p221 = scmp.ne.s32.totalorder %s206, %s220
      %p222 = scmp.eq.s32.totalorder %s28, 0
      %p223 = por %p221, %p222
      %s225 = sadd.s32 %s224, 1
      %p228 = scmp.eq.s32.totalorder %s22, 3
      %p229 = scmp.ne.s32.totalorder %s224, %s226
      %p230 = scmp.eq.s32.totalorder %s22, 0
      %p231 = por %p229, %p230
      %p232 = scmp.ne.s32.totalorder %s224, %s226
      %p233 = scmp.eq.s32.totalorder %s27, 3
      %p234 = por %p232, %p233
      %p235 = scmp.ne.s32.totalorder %s226, %s227
      %p236 = scmp.eq.s32.totalorder %s27, 0
      %p237 = por %p235, %p236
      %p238 = scmp.ne.s32.totalorder %s226, %s227
      %p239 = scmp.eq.s32.totalorder %s28, 3
      %p240 = por %p238, %p239
      %p242 = scmp.ne.s32.totalorder %s227, %s241
      %p243 = scmp.eq.s32.totalorder %s28, 0
      %p244 = por %p242, %p243
      %s246 = sadd.s32 %s245, 1
      %p249 = scmp.eq.s32.totalorder %s22, 3
      %p250 = scmp.ne.s32.totalorder %s245, %s247
      %p251 = scmp.eq.s32.totalorder %s22, 0
      %p252 = por %p250, %p251
      %p253 = scmp.ne.s32.totalorder %s245, %s247
      %p254 = scmp.eq.s32.totalorder %s27, 3
      %p255 = por %p253, %p254
      %p256 = scmp.ne.s32.totalorder %s247, %s248
      %p257 = scmp.eq.s32.totalorder %s27, 0
      %p258 = por %p256, %p257
      %p259 = scmp.ne.s32.totalorder %s247, %s248
      %p260 = scmp.eq.s32.totalorder %s28, 3
      %p261 = por %p259, %p260
      %p263 = scmp.ne.s32.totalorder %s248, %s262
      %p264 = scmp.eq.s32.totalorder %s28, 0
      %p265 = por %p263, %p264
      %s266 = ssub.s32 %s22, %s29
      %p267 = scmp.eq.s32.totalorder %s266, 0
      %s269 = sadd.s32 %s268, 1
      %s270 = scalar_select %p267, %s268, %s269
      %p273 = pneg %p267
      %p274 = scmp.eq.s32.totalorder %s22, 3
      %p275 = por %p273, %p274
      %p276 = scmp.ne.s32.totalorder %s268, %s271
      %p277 = scmp.eq.s32.totalorder %s22, 0
      %p278 = por %p276, %p277
      %p279 = scmp.ne.s32.totalorder %s268, %s271
      %p280 = scmp.eq.s32.totalorder %s27, 3
      %p281 = por %p279, %p280
      %p282 = scmp.ne.s32.totalorder %s271, %s272
      %p283 = scmp.eq.s32.totalorder %s27, 0
      %p284 = por %p282, %p283
      %p285 = scmp.ne.s32.totalorder %s271, %s272
      %p286 = scmp.eq.s32.totalorder %s28, 3
      %p287 = por %p285, %p286
      %p289 = scmp.ne.s32.totalorder %s272, %s288
      %p290 = scmp.eq.s32.totalorder %s28, 0
      %p291 = por %p289, %p290
      %p292 = scmp.le.s32.totalorder 1, %s22
      %p293 = scmp.lt.s32.totalorder %s22, 5
      %p294 = pnand %p292, %p293
      %p295 = pneg %p294
      // Predicated region
      $region9: #{tpu_custom_call.1} parent=5 // pred_check
        _
      $region10: #{tpu_custom_call.1} parent=5 // pred_check_branch
        %297 = sbr.rel (%p294) target = $region12
      $region11: #{tpu_custom_call.1} parent=5 // pred_region
        %s298 = ssub.s32 %s22, 1
        // Predicated region
        $region13: #{tpu_custom_call.1} parent=11 // pred_check
          %p299 = pneg %p69
        $region14: #{tpu_custom_call.1} parent=11 // pred_check_branch
          %301 = sbr.rel (%p299) target = $region16
        $region15: #{tpu_custom_call.1} parent=11 // pred_region
          %303 = vsyncadd [#allocation4], 0
          %s305 = sshll.u32 %s1, 4
          %s306 = int_to_ptr.hbm [resolvable:$true] %s305
          %s307 = sshll.u32 [#allocation3], 4
          %s308 = int_to_ptr.vmem [resolvable:$true] %s307
          %310 = dma.hbm_to_vmem [thread:$0]  %s306, 16, %s308, [#allocation4]
        $region16: #{tpu_custom_call.1} parent=11 // pred_fallthru
          _
        // Predicated region
        $region17: #{tpu_custom_call.1} parent=11 // pred_check
          %p311 = pneg %p90
        $region18: #{tpu_custom_call.1} parent=11 // pred_check_branch
          %313 = sbr.rel (%p311) target = $region20
        $region19: #{tpu_custom_call.1} parent=11 // pred_region
          _
        $region20: #{tpu_custom_call.1} parent=11 // pred_fallthru
          _
        // Predicated region
        $region21: #{tpu_custom_call.1} parent=11 // pred_check
          %p314 = pneg %p111
        $region22: #{tpu_custom_call.1} parent=11 // pred_check_branch
          %316 = sbr.rel (%p314) target = $region24
        $region23: #{tpu_custom_call.1} parent=11 // pred_region
          _
        $region24: #{tpu_custom_call.1} parent=11 // pred_fallthru
          _
        // Predicated region
        $region25: #{tpu_custom_call.1} parent=11 // pred_check
          %p317 = pneg %p132
        $region26: #{tpu_custom_call.1} parent=11 // pred_check_branch
          %319 = sbr.rel (%p317) target = $region28
        $region27: #{tpu_custom_call.1} parent=11 // pred_region
          _
        $region28: #{tpu_custom_call.1} parent=11 // pred_fallthru
          _
        // Predicated region
        $region29: #{tpu_custom_call.1} parent=11 // pred_check
          %p320 = pneg %p153
        $region30: #{tpu_custom_call.1} parent=11 // pred_check_branch
          %322 = sbr.rel (%p320) target = $region32
        $region31: #{tpu_custom_call.1} parent=11 // pred_region
          _
        $region32: #{tpu_custom_call.1} parent=11 // pred_fallthru
          _
        // Predicated region
        $region33: #{tpu_custom_call.1} parent=11 // pred_check
          %p323 = pneg %p174
        $region34: #{tpu_custom_call.1} parent=11 // pred_check_branch
          %325 = sbr.rel (%p323) target = $region36
        $region35: #{tpu_custom_call.1} parent=11 // pred_region
          _
        $region36: #{tpu_custom_call.1} parent=11 // pred_fallthru
          _
        // Predicated region
        $region37: #{tpu_custom_call.1} parent=11 // pred_check
          %p326 = pneg %p195
        $region38: #{tpu_custom_call.1} parent=11 // pred_check_branch
          %328 = sbr.rel (%p326) target = $region40
        $region39: #{tpu_custom_call.1} parent=11 // pred_region
          %330 = vsyncadd [#allocation7], 0
          %s331 = sshll.u32 %s7, 4
          %s332 = int_to_ptr.hbm [resolvable:$true] %s331
          %s333 = sshll.u32 [#allocation6], 4
          %s334 = int_to_ptr.vmem [resolvable:$true] %s333
          %339 = dma.hbm_to_vmem [thread:$0]  %s332, 512, %s334, [#allocation7], 128, 128, 8
        $region40: #{tpu_custom_call.1} parent=11 // pred_fallthru
          _
        // Predicated region
        $region41: #{tpu_custom_call.1} parent=11 // pred_check
          %p340 = pneg %p216
        $region42: #{tpu_custom_call.1} parent=11 // pred_check_branch
          %342 = sbr.rel (%p340) target = $region44
        $region43: #{tpu_custom_call.1} parent=11 // pred_region
          _
        $region44: #{tpu_custom_call.1} parent=11 // pred_fallthru
          _
        // Predicated region
        $region45: #{tpu_custom_call.1} parent=11 // pred_check
          %p343 = pneg %p237
        $region46: #{tpu_custom_call.1} parent=11 // pred_check_branch
          %345 = sbr.rel (%p343) target = $region48
        $region47: #{tpu_custom_call.1} parent=11 // pred_region
          _
        $region48: #{tpu_custom_call.1} parent=11 // pred_fallthru
          _
        // Predicated region
        $region49: #{tpu_custom_call.1} parent=11 // pred_check
          %p346 = pneg %p258
        $region50: #{tpu_custom_call.1} parent=11 // pred_check_branch
          %348 = sbr.rel (%p346) target = $region52
        $region51: #{tpu_custom_call.1} parent=11 // pred_region
          _
        $region52: #{tpu_custom_call.1} parent=11 // pred_fallthru
          _
      $region12: #{tpu_custom_call.1} parent=5 // pred_fallthru
        _
      %p349 = scmp.lt.s32.totalorder %s22, 4
      // Predicated region
      $region53: #{tpu_custom_call.1} parent=5 // pred_check
        %p350 = pneg %p349
      $region54: #{tpu_custom_call.1} parent=5 // pred_check_branch
        %352 = sbr.rel (%p350) target = $region56
      $region55: #{tpu_custom_call.1} parent=5 // pred_region
        // Predicated region
        $region57: #{tpu_custom_call.1} parent=55 // pred_check
          %p353 = pneg %p42
        $region58: #{tpu_custom_call.1} parent=55 // pred_check_branch
          %355 = sbr.rel (%p353) target = $region60
        $region59: #{tpu_custom_call.1} parent=55 // pred_region
          %p356 = scmp.lt.s32.totalorder %s22, 3
          %s357 = scalar_select %p356, %s22, 3
          %s358 = smul.addr %s357, 8
          %s359 = scalar_lea.vmem %s0, %s358
        $region60: #{tpu_custom_call.1} parent=55 // pred_fallthru
          _
      $region56: #{tpu_custom_call.1} parent=5 // pred_fallthru
        _
      %p360 = scmp.le.s32.totalorder 1, %s22
      %p361 = scmp.lt.s32.totalorder %s22, 5
      %p362 = pnand %p360, %p361
      %p363 = pneg %p362
      // Predicated region
      $region61: #{tpu_custom_call.1} parent=5 // pred_check
        _
      $region62: #{tpu_custom_call.1} parent=5 // pred_check_branch
        %365 = sbr.rel (%p362) target = $region64
      $region63: #{tpu_custom_call.1} parent=5 // pred_region
        %s366 = ssub.s32 %s22, 1
        // Predicated region
        $region65: #{tpu_custom_call.1} parent=63 // pred_check
          %p367 = pneg %p69
        $region66: #{tpu_custom_call.1} parent=63 // pred_check_branch
          %369 = sbr.rel (%p367) target = $region68
        $region67: #{tpu_custom_call.1} parent=63 // pred_region
          %371 = dma.done [#allocation4], 16
        $region68: #{tpu_custom_call.1} parent=63 // pred_fallthru
          _
        // Predicated region
        $region69: #{tpu_custom_call.1} parent=63 // pred_check
          %p372 = pneg %p195
        $region70: #{tpu_custom_call.1} parent=63 // pred_check_branch
          %374 = sbr.rel (%p372) target = $region72
        $region71: #{tpu_custom_call.1} parent=63 // pred_region
          %376 = dma.done [#allocation7], 512
        $region72: #{tpu_custom_call.1} parent=63 // pred_fallthru
          _
        %p377 = scmp.lt.s32.totalorder %s27, 3
        %s378 = scalar_select %p377, %s27, 3
        %s379 = smul.addr %s378, 8
        %s380 = scalar_lea.vmem %s0, %s379
        %p381 = pneg %p48
        %p382 = pneg %p45
        %p383 = pneg %p69
        %p384 = pneg %p66
        %p385 = pneg %p90
        %p386 = pneg %p87
        %p387 = pneg %p111
        %p388 = pneg %p108
        %p389 = pneg %p132
        %p390 = pneg %p129
        %p391 = pneg %p153
        %p392 = pneg %p150
        %p393 = pneg %p174
        %p394 = pneg %p171
        %p395 = pneg %p195
        %p396 = pneg %p192
        %p397 = pneg %p216
        %p398 = pneg %p213
        %p399 = pneg %p237
        %p400 = pneg %p234
        %p401 = pneg %p258
        %p402 = pneg %p255
        %p403 = pneg %p284
        %p404 = pneg %p281
        %s405 = sand.u32 %s271, 1
        %s406 = scalar_lea.sflag [#allocation5], %s405
        %s407 = sand.u32 %s271, 1
        %s408 = smul.addr %s407, 8
        %s409 = scalar_lea.vmem [#allocation8], %s408
        %p410 = scmp.lt.s32.totalorder %s27, 3
        %s411 = scalar_select %p410, %s27, 3
        %s412 = smul.addr %s411, 8
        %s413 = scalar_lea.vmem %s0, %s412
        %v414 = vld [vmem:[%s413] sm:$0xff]
        %v415 = vld [vmem:[#allocation3] sm:$0x1]
        %v416 = vld [vmem:[%s2] sm:$0x1]
        %vm417 = vcmask 261120
        %v418 = vsel %vm417, %v414, 0.0
        %419 = vadd.xlane.f32.xlu0 %v418
        %v420 = vpop.xlane.xlu0 %419
        %v421 = vrcp.pop 32.0
        %v422 = vmul.f32 32.0, %v421
        %v423 = vsub.f32 1.0, %v422
        %v424 = vmul.f32 %v421, %v423
        %v425 = vadd.f32 %v421, %v424
        %vm426 = vweird.f32 %v421
        %v427 = vsel %vm426, %v421, %v425
        %v428 = vmul.f32 %v420, %v427
        %v429 = vsub.f32 %v414, %v428
        %v430 = vmul.f32 %v429, %v429
        %v431 = vsel %vm417, %v430, 0.0
        %432 = vadd.xlane.f32.xlu0 %v431
        %v433 = vpop.xlane.xlu0 %432
        %v434 = vmul.f32 %v433, %v427
        %v435 = vadd.f32 %v434, 1e-05
        %v436 = vrsqrt.pop %v435
        %v437 = vmul.f32 %v436, %v435
        %v438 = vmul.f32 %v437, %v436
        %v439 = vmul.f32 0.5, %v438
        %v440 = vsub.f32 1.5, %v439
        %v441 = vmul.f32 %v436, %v440
        %vm442 = vweird.f32 %v435
        %vm443 = vweird.f32 %v436
        %vm444 = vmor %vm442, %vm443
        %v445 = vsel %vm444, %v436, %v441
        %v446 = vmul.f32 %v429, %v445
        %v448 = vperm.slane %v415, 0
        %v450 = vmul.f32 %v446, %v448
        %v452 = vperm.slane %v416, 0
        %v454 = vadd.f32 %v450, %v452
        %v455 = vld [vmem:[%s3] sm:$0xff]
        %v456 = vld [vmem:[%s3 + $0x8] sm:$0xff]
        %v457 = vld [vmem:[%s3 + $0x10] sm:$0xff]
        %v458 = vld [vmem:[%s3 + $0x18] sm:$0xff]
        %v459 = vld [vmem:[%s4] sm:$0x1]
        %v461 = vperm.slane %v459, 0
        %v464 = vsel %vm417, %v454, 0
        %466 = vmatpush.msra.mxu0 0.0
        %467 = vmatpush.msra.mxu0 0.0
        %468 = vmatpush.msra.mxu0 0.0
        %469 = vmatpush.msra.mxu0 0.0
        %470 = vmatpush.msra.mxu0 0.0
        %471 = vmatpush.msra.mxu0 0.0
        %472 = vmatpush.msra.mxu0 0.0
        %473 = vmatpush.msra.mxu0 0.0
        %474 = vmatpush.msra.mxu0 0.0
        %475 = vmatpush.msra.mxu0 0.0
        %476 = vmatpush.msra.mxu0 0.0
        %477 = vmatpush.msra.mxu0 0.0
        %478 = vmatpush.msra.mxu0 %v458
        %479 = vmatpush.msra.mxu0 %v457
        %480 = vmatpush.msra.mxu0 %v456
        %481 = vmatpush.msra.mxu0 %v455
        %482 = vmatmul.f32.gmra.mxu0 %v464
        %v483 = vpop.f32.mrf.mxu0
        %v484 = vadd.f32 %v461, %v483
        %485 = vdwg.mxu0
        %487 = vrot.lane.b32.xlu0 %v484, 96
        %v488 = vpop.permute.xlu0 %487
        %vm489 = vcmask 64512
        %v490 = vsel %vm489, %v484, 0
        %v492 = vsel %vm489, %v488, 0
        %494 = vmatpush.xpose.msra.mxu0 0.0
        %495 = vmatpush.xpose.msra.mxu0 0.0
        %496 = vmatpush.xpose.msra.mxu0 0.0
        %497 = vmatpush.xpose.msra.mxu0 0.0
        %498 = vmatpush.xpose.msra.mxu0 0.0
        %499 = vmatpush.xpose.msra.mxu0 0.0
        %500 = vmatpush.xpose.msra.mxu0 0.0
        %501 = vmatpush.xpose.msra.mxu0 0.0
        %502 = vmatpush.xpose.msra.mxu0 0.0
        %503 = vmatpush.xpose.msra.mxu0 0.0
        %504 = vmatpush.xpose.msra.mxu0 0.0
        %505 = vmatpush.xpose.msra.mxu0 0.0
        %506 = vmatpush.xpose.msra.mxu0 0.0
        %507 = vmatpush.xpose.msra.mxu0 0.0
        %508 = vmatpush.xpose.msra.mxu0 0.0
        %509 = vmatpush.xpose.msra.mxu0 %v492
        %510 = vmatmul.f32.gmra.mxu0 %v490
        %v511 = vpop.f32.mrf.mxu0
        %v512 = vadd.f32 0.0, %v511
        %513 = vdwg.mxu0
        %v514 = vsel %vm489, %v512, -inf
        %515 = vmax.xlane.f32.xlu0 %v514
        %v516 = vpop.xlane.xlu0 %515
        %v517 = vsub.f32 %v512, %v516
        %v518 = vmul.f32 %v517, 1.442695
        %v519 = vpow.pop %v518
        %v520 = vsel %vm489, %v519, 0.0
        %521 = vadd.xlane.f32.xlu0 %v520
        %v522 = vpop.xlane.xlu0 %521
        %v523 = vrcp.pop %v522
        %v524 = vmul.f32 %v522, %v523
        %v525 = vsub.f32 1.0, %v524
        %v526 = vmul.f32 %v523, %v525
        %v527 = vadd.f32 %v523, %v526
        %vm528 = vweird.f32 %v522
        %vm529 = vweird.f32 %v523
        %vm530 = vmor %vm528, %vm529
        %v531 = vsel %vm530, %v523, %v527
        %v532 = vand.u32 2147483647, %v522
        %vm533 = vcmp.eq.f32.partialorder %v532, 8.507059e+37
        %v534 = vand.u32 %v522, 2147483648
        %v535 = vor.u32 1.1754944e-38, %v534
        %v536 = vsel %vm533, %v535, %v531
        %v537 = vmul.f32 %v519, %v536
        %538 = vrot.lane.b32.xlu0 %v484, 64
        %v539 = vpop.permute.xlu0 %538
        %v542 = vsel %vm489, %v537, 0
        %544 = vmatpush.msra.mxu0 0.0
        %545 = vmatpush.msra.mxu0 0.0
        %546 = vmatpush.msra.mxu0 0.0
        %547 = vmatpush.msra.mxu0 0.0
        %548 = vmatpush.msra.mxu0 0.0
        %549 = vmatpush.msra.mxu0 0.0
        %550 = vmatpush.msra.mxu0 0.0
        %551 = vmatpush.msra.mxu0 0.0
        %552 = vmatpush.msra.mxu0 0.0
        %553 = vmatpush.msra.mxu0 0.0
        %554 = vmatpush.msra.mxu0 0.0
        %555 = vmatpush.msra.mxu0 0.0
        %556 = vmatpush.msra.mxu0 0.0
        %557 = vmatpush.msra.mxu0 0.0
        %558 = vmatpush.msra.mxu0 0.0
        %559 = vmatpush.msra.mxu0 %v539
        %560 = vmatmul.f32.gmra.mxu0 %v542
        %v561 = vpop.f32.mrf.mxu0
        %v562 = vadd.f32 0.0, %v561
        %563 = vdwg.mxu0
        %564 = vst.msk [vmem:[#allocation2] sm:$0xff] %vm489, %v562
        %565 = vrot.lane.b32.xlu0 %v484, 120
        %v566 = vpop.permute.xlu0 %565
        %567 = vrot.lane.b32.xlu0 %v484, 88
        %v568 = vpop.permute.xlu0 %567
        %v569 = vsel %vm489, %v566, 0
        %v571 = vsel %vm489, %v568, 0
        %573 = vmatpush.xpose.msra.mxu0 0.0
        %574 = vmatpush.xpose.msra.mxu0 0.0
        %575 = vmatpush.xpose.msra.mxu0 0.0
        %576 = vmatpush.xpose.msra.mxu0 0.0
        %577 = vmatpush.xpose.msra.mxu0 0.0
        %578 = vmatpush.xpose.msra.mxu0 0.0
        %579 = vmatpush.xpose.msra.mxu0 0.0
        %580 = vmatpush.xpose.msra.mxu0 0.0
        %581 = vmatpush.xpose.msra.mxu0 0.0
        %582 = vmatpush.xpose.msra.mxu0 0.0
        %583 = vmatpush.xpose.msra.mxu0 0.0
        %584 = vmatpush.xpose.msra.mxu0 0.0
        %585 = vmatpush.xpose.msra.mxu0 0.0
        %586 = vmatpush.xpose.msra.mxu0 0.0
        %587 = vmatpush.xpose.msra.mxu0 0.0
        %588 = vmatpush.xpose.msra.mxu0 %v571
        %589 = vmatmul.f32.gmra.mxu0 %v569
        %v590 = vpop.f32.mrf.mxu0
        %v591 = vadd.f32 0.0, %v590
        %592 = vdwg.mxu0
        %v593 = vsel %vm489, %v591, -inf
        %594 = vmax.xlane.f32.xlu0 %v593
        %v595 = vpop.xlane.xlu0 %594
        %v596 = vsub.f32 %v591, %v595
        %v597 = vmul.f32 %v596, 1.442695
        %v598 = vpow.pop %v597
        %v599 = vsel %vm489, %v598, 0.0
        %600 = vadd.xlane.f32.xlu0 %v599
        %v601 = vpop.xlane.xlu0 %600
        %v602 = vrcp.pop %v601
        %v603 = vmul.f32 %v601, %v602
        %v604 = vsub.f32 1.0, %v603
        %v605 = vmul.f32 %v602, %v604
        %v606 = vadd.f32 %v602, %v605
        %vm607 = vweird.f32 %v601
        %vm608 = vweird.f32 %v602
        %vm609 = vmor %vm607, %vm608
        %v610 = vsel %vm609, %v602, %v606
        %v611 = vand.u32 2147483647, %v601
        %vm612 = vcmp.eq.f32.partialorder %v611, 8.507059e+37
        %v613 = vand.u32 %v601, 2147483648
        %v614 = vor.u32 1.1754944e-38, %v613
        %v615 = vsel %vm612, %v614, %v610
        %v616 = vmul.f32 %v598, %v615
        %617 = vrot.lane.b32.xlu0 %v484, 56
        %v618 = vpop.permute.xlu0 %617
        %v621 = vsel %vm489, %v616, 0
        %623 = vmatpush.msra.mxu0 0.0
        %624 = vmatpush.msra.mxu0 0.0
        %625 = vmatpush.msra.mxu0 0.0
        %626 = vmatpush.msra.mxu0 0.0
        %627 = vmatpush.msra.mxu0 0.0
        %628 = vmatpush.msra.mxu0 0.0
        %629 = vmatpush.msra.mxu0 0.0
        %630 = vmatpush.msra.mxu0 0.0
        %631 = vmatpush.msra.mxu0 0.0
        %632 = vmatpush.msra.mxu0 0.0
        %633 = vmatpush.msra.mxu0 0.0
        %634 = vmatpush.msra.mxu0 0.0
        %635 = vmatpush.msra.mxu0 0.0
        %636 = vmatpush.msra.mxu0 0.0
        %637 = vmatpush.msra.mxu0 0.0
        %638 = vmatpush.msra.mxu0 %v618
        %639 = vmatmul.f32.gmra.mxu0 %v621
        %v640 = vpop.f32.mrf.mxu0
        %v641 = vadd.f32 0.0, %v640
        %642 = vdwg.mxu0
        %644 = vrot.lane.b32.xlu0 %v641, 8
        %v645 = vpop.permute.xlu0 %644
        %vm647 = vcmask 130112
        %648 = vst.msk [vmem:[#allocation2] sm:$0xff] %vm647, %v645
        %649 = vrot.lane.b32.xlu0 %v484, 112
        %v650 = vpop.permute.xlu0 %649
        %651 = vrot.lane.b32.xlu0 %v484, 80
        %v652 = vpop.permute.xlu0 %651
        %v653 = vsel %vm489, %v650, 0
        %v655 = vsel %vm489, %v652, 0
        %657 = vmatpush.xpose.msra.mxu0 0.0
        %658 = vmatpush.xpose.msra.mxu0 0.0
        %659 = vmatpush.xpose.msra.mxu0 0.0
        %660 = vmatpush.xpose.msra.mxu0 0.0
        %661 = vmatpush.xpose.msra.mxu0 0.0
        %662 = vmatpush.xpose.msra.mxu0 0.0
        %663 = vmatpush.xpose.msra.mxu0 0.0
        %664 = vmatpush.xpose.msra.mxu0 0.0
        %665 = vmatpush.xpose.msra.mxu0 0.0
        %666 = vmatpush.xpose.msra.mxu0 0.0
        %667 = vmatpush.xpose.msra.mxu0 0.0
        %668 = vmatpush.xpose.msra.mxu0 0.0
        %669 = vmatpush.xpose.msra.mxu0 0.0
        %670 = vmatpush.xpose.msra.mxu0 0.0
        %671 = vmatpush.xpose.msra.mxu0 0.0
        %672 = vmatpush.xpose.msra.mxu0 %v655
        %673 = vmatmul.f32.gmra.mxu0 %v653
        %v674 = vpop.f32.mrf.mxu0
        %v675 = vadd.f32 0.0, %v674
        %676 = vdwg.mxu0
        %v677 = vsel %vm489, %v675, -inf
        %678 = vmax.xlane.f32.xlu0 %v677
        %v679 = vpop.xlane.xlu0 %678
        %v680 = vsub.f32 %v675, %v679
        %v681 = vmul.f32 %v680, 1.442695
        %v682 = vpow.pop %v681
        %v683 = vsel %vm489, %v682, 0.0
        %684 = vadd.xlane.f32.xlu0 %v683
        %v685 = vpop.xlane.xlu0 %684
        %v686 = vrcp.pop %v685
        %v687 = vmul.f32 %v685, %v686
        %v688 = vsub.f32 1.0, %v687
        %v689 = vmul.f32 %v686, %v688
        %v690 = vadd.f32 %v686, %v689
        %vm691 = vweird.f32 %v685
        %vm692 = vweird.f32 %v686
        %vm693 = vmor %vm691, %vm692
        %v694 = vsel %vm693, %v686, %v690
        %v695 = vand.u32 2147483647, %v685
        %vm696 = vcmp.eq.f32.partialorder %v695, 8.507059e+37
        %v697 = vand.u32 %v685, 2147483648
        %v698 = vor.u32 1.1754944e-38, %v697
        %v699 = vsel %vm696, %v698, %v694
        %v700 = vmul.f32 %v682, %v699
        %701 = vrot.lane.b32.xlu0 %v484, 48
        %v702 = vpop.permute.xlu0 %701
        %v705 = vsel %vm489, %v700, 0
        %707 = vmatpush.msra.mxu0 0.0
        %708 = vmatpush.msra.mxu0 0.0
        %709 = vmatpush.msra.mxu0 0.0
        %710 = vmatpush.msra.mxu0 0.0
        %711 = vmatpush.msra.mxu0 0.0
        %712 = vmatpush.msra.mxu0 0.0
        %713 = vmatpush.msra.mxu0 0.0
        %714 = vmatpush.msra.mxu0 0.0
        %715 = vmatpush.msra.mxu0 0.0
        %716 = vmatpush.msra.mxu0 0.0
        %717 = vmatpush.msra.mxu0 0.0
        %718 = vmatpush.msra.mxu0 0.0
        %719 = vmatpush.msra.mxu0 0.0
        %720 = vmatpush.msra.mxu0 0.0
        %721 = vmatpush.msra.mxu0 0.0
        %722 = vmatpush.msra.mxu0 %v702
        %723 = vmatmul.f32.gmra.mxu0 %v705
        %v724 = vpop.f32.mrf.mxu0
        %v725 = vadd.f32 0.0, %v724
        %726 = vdwg.mxu0
        %728 = vrot.lane.b32.xlu0 %v725, 16
        %v729 = vpop.permute.xlu0 %728
        %vm731 = vcmask 195712
        %732 = vst.msk [vmem:[#allocation2] sm:$0xff] %vm731, %v729
        %733 = vrot.lane.b32.xlu0 %v484, 104
        %v734 = vpop.permute.xlu0 %733
        %735 = vrot.lane.b32.xlu0 %v484, 72
        %v736 = vpop.permute.xlu0 %735
        %v737 = vsel %vm489, %v734, 0
        %v739 = vsel %vm489, %v736, 0
        %741 = vmatpush.xpose.msra.mxu0 0.0
        %742 = vmatpush.xpose.msra.mxu0 0.0
        %743 = vmatpush.xpose.msra.mxu0 0.0
        %744 = vmatpush.xpose.msra.mxu0 0.0
        %745 = vmatpush.xpose.msra.mxu0 0.0
        %746 = vmatpush.xpose.msra.mxu0 0.0
        %747 = vmatpush.xpose.msra.mxu0 0.0
        %748 = vmatpush.xpose.msra.mxu0 0.0
        %749 = vmatpush.xpose.msra.mxu0 0.0
        %750 = vmatpush.xpose.msra.mxu0 0.0
        %751 = vmatpush.xpose.msra.mxu0 0.0
        %752 = vmatpush.xpose.msra.mxu0 0.0
        %753 = vmatpush.xpose.msra.mxu0 0.0
        %754 = vmatpush.xpose.msra.mxu0 0.0
        %755 = vmatpush.xpose.msra.mxu0 0.0
        %756 = vmatpush.xpose.msra.mxu0 %v739
        %757 = vmatmul.f32.gmra.mxu0 %v737
        %v758 = vpop.f32.mrf.mxu0
        %v759 = vadd.f32 0.0, %v758
        %760 = vdwg.mxu0
        %v761 = vsel %vm489, %v759, -inf
        %762 = vmax.xlane.f32.xlu0 %v761
        %v763 = vpop.xlane.xlu0 %762
        %v764 = vsub.f32 %v759, %v763
        %v765 = vmul.f32 %v764, 1.442695
        %v766 = vpow.pop %v765
        %v767 = vsel %vm489, %v766, 0.0
        %768 = vadd.xlane.f32.xlu0 %v767
        %v769 = vpop.xlane.xlu0 %768
        %v770 = vrcp.pop %v769
        %v771 = vmul.f32 %v769, %v770
        %v772 = vsub.f32 1.0, %v771
        %v773 = vmul.f32 %v770, %v772
        %v774 = vadd.f32 %v770, %v773
        %vm775 = vweird.f32 %v769
        %vm776 = vweird.f32 %v770
        %vm777 = vmor %vm775, %vm776
        %v778 = vsel %vm777, %v770, %v774
        %v779 = vand.u32 2147483647, %v769
        %vm780 = vcmp.eq.f32.partialorder %v779, 8.507059e+37
        %v781 = vand.u32 %v769, 2147483648
        %v782 = vor.u32 1.1754944e-38, %v781
        %v783 = vsel %vm780, %v782, %v778
        %v784 = vmul.f32 %v766, %v783
        %785 = vrot.lane.b32.xlu0 %v484, 40
        %v786 = vpop.permute.xlu0 %785
        %v789 = vsel %vm489, %v784, 0
        %791 = vmatpush.msra.mxu0 0.0
        %792 = vmatpush.msra.mxu0 0.0
        %793 = vmatpush.msra.mxu0 0.0
        %794 = vmatpush.msra.mxu0 0.0
        %795 = vmatpush.msra.mxu0 0.0
        %796 = vmatpush.msra.mxu0 0.0
        %797 = vmatpush.msra.mxu0 0.0
        %798 = vmatpush.msra.mxu0 0.0
        %799 = vmatpush.msra.mxu0 0.0
        %800 = vmatpush.msra.mxu0 0.0
        %801 = vmatpush.msra.mxu0 0.0
        %802 = vmatpush.msra.mxu0 0.0
        %803 = vmatpush.msra.mxu0 0.0
        %804 = vmatpush.msra.mxu0 0.0
        %805 = vmatpush.msra.mxu0 0.0
        %806 = vmatpush.msra.mxu0 %v786
        %807 = vmatmul.f32.gmra.mxu0 %v789
        %v808 = vpop.f32.mrf.mxu0
        %v809 = vadd.f32 0.0, %v808
        %810 = vdwg.mxu0
        %812 = vrot.lane.b32.xlu0 %v809, 24
        %v813 = vpop.permute.xlu0 %812
        %vm815 = vcmask 261312
        %816 = vst.msk [vmem:[#allocation2] sm:$0xff] %vm815, %v813
        %v817 = vld [vmem:[#allocation2] sm:$0xff]
        %v818 = vld [vmem:[%s5] sm:$0xff]
        %v819 = vld [vmem:[%s5 + $0x8] sm:$0xff]
        %v820 = vld [vmem:[%s5 + $0x10] sm:$0xff]
        %v821 = vld [vmem:[%s5 + $0x18] sm:$0xff]
        %v822 = vld [vmem:[%s6] sm:$0x1]
        %v824 = vperm.slane %v822, 0
        %v827 = vsel %vm417, %v817, 0
        %829 = vmatpush.msra.mxu0 0.0
        %830 = vmatpush.msra.mxu0 0.0
        %831 = vmatpush.msra.mxu0 0.0
        %832 = vmatpush.msra.mxu0 0.0
        %833 = vmatpush.msra.mxu0 0.0
        %834 = vmatpush.msra.mxu0 0.0
        %835 = vmatpush.msra.mxu0 0.0
        %836 = vmatpush.msra.mxu0 0.0
        %837 = vmatpush.msra.mxu0 0.0
        %838 = vmatpush.msra.mxu0 0.0
        %839 = vmatpush.msra.mxu0 0.0
        %840 = vmatpush.msra.mxu0 0.0
        %841 = vmatpush.msra.mxu0 %v821
        %842 = vmatpush.msra.mxu0 %v820
        %843 = vmatpush.msra.mxu0 %v819
        %844 = vmatpush.msra.mxu0 %v818
        %845 = vmatmul.f32.gmra.mxu0 %v827
        %v846 = vpop.f32.mrf.mxu0
        %v847 = vadd.f32 %v824, %v846
        %848 = vdwg.mxu0
        %v849 = vadd.f32 %v847, %v414
        %v850 = vsel %vm417, %v849, 0.0
        %851 = vadd.xlane.f32.xlu0 %v850
        %v852 = vpop.xlane.xlu0 %851
        %v853 = vmul.f32 %v852, %v427
        %v854 = vsub.f32 %v849, %v853
        %v855 = vmul.f32 %v854, %v854
        %v856 = vsel %vm417, %v855, 0.0
        %857 = vadd.xlane.f32.xlu0 %v856
        %v858 = vpop.xlane.xlu0 %857
        %v859 = vmul.f32 %v858, %v427
        %v860 = vadd.f32 %v859, 1e-05
        %v861 = vrsqrt.pop %v860
        %v862 = vmul.f32 %v861, %v860
        %v863 = vmul.f32 %v862, %v861
        %v864 = vmul.f32 0.5, %v863
        %v865 = vsub.f32 1.5, %v864
        %v866 = vmul.f32 %v861, %v865
        %vm867 = vweird.f32 %v860
        %vm868 = vweird.f32 %v861
        %vm869 = vmor %vm867, %vm868
        %v870 = vsel %vm869, %v861, %v866
        %v871 = vmul.f32 %v854, %v870
        %v872 = vmul.f32 %v871, %v448
        %v873 = vadd.f32 %v872, %v452
        %v874 = vld [vmem:[#allocation6] sm:$0xff]
        %v875 = vld [vmem:[#allocation6 + $0x8] sm:$0xff]
        %v876 = vld [vmem:[#allocation6 + $0x10] sm:$0xff]
        %v877 = vld [vmem:[#allocation6 + $0x18] sm:$0xff]
        %v878 = vld [vmem:[%s8] sm:$0x1]
        %v880 = vperm.slane %v878, 0
        %v883 = vsel %vm417, %v873, 0
        %885 = vmatpush.msra.mxu0 0.0
        %886 = vmatpush.msra.mxu0 0.0
        %887 = vmatpush.msra.mxu0 0.0
        %888 = vmatpush.msra.mxu0 0.0
        %889 = vmatpush.msra.mxu0 0.0
        %890 = vmatpush.msra.mxu0 0.0
        %891 = vmatpush.msra.mxu0 0.0
        %892 = vmatpush.msra.mxu0 0.0
        %893 = vmatpush.msra.mxu0 0.0
        %894 = vmatpush.msra.mxu0 0.0
        %895 = vmatpush.msra.mxu0 0.0
        %896 = vmatpush.msra.mxu0 0.0
        %897 = vmatpush.msra.mxu0 %v877
        %898 = vmatpush.msra.mxu0 %v876
        %899 = vmatpush.msra.mxu0 %v875
        %900 = vmatpush.msra.mxu0 %v874
        %901 = vmatmul.f32.gmra.mxu0 %v883
        %v902 = vpop.f32.mrf.mxu0
        %v903 = vadd.f32 %v880, %v902
        %904 = vdwg.mxu0
        %v905 = vmul.f32 %v903, 0.5
        %v906 = vmul.f32 %v903, 0.044715
        %v907 = vmul.f32 %v906, %v903
        %v908 = vmul.f32 %v907, %v903
        %v909 = vadd.f32 %v903, %v908
        %v910 = vmul.f32 %v909, 0.7978846
        %v911 = vtanh.pop %v910
        %v912 = vadd.f32 %v911, 1.0
        %v913 = vmul.f32 %v905, %v912
        %v914 = vld [vmem:[%s9] sm:$0xff]
        %v915 = vld [vmem:[%s9 + $0x8] sm:$0xff]
        %v916 = vld [vmem:[%s9 + $0x10] sm:$0xff]
        %v917 = vld [vmem:[%s9 + $0x18] sm:$0xff]
        %v918 = vld [vmem:[%s9 + $0x20] sm:$0xff]
        %v919 = vld [vmem:[%s9 + $0x28] sm:$0xff]
        %v920 = vld [vmem:[%s9 + $0x30] sm:$0xff]
        %v921 = vld [vmem:[%s9 + $0x38] sm:$0xff]
        %v922 = vld [vmem:[%s10] sm:$0x1]
        %v924 = vperm.slane %v922, 0
        %vm926 = vcmask 523264
        %v928 = vsel %vm926, %v913, 0
        %930 = vmatpush.msra.mxu0 0.0
        %931 = vmatpush.msra.mxu0 0.0
        %932 = vmatpush.msra.mxu0 0.0
        %933 = vmatpush.msra.mxu0 0.0
        %934 = vmatpush.msra.mxu0 0.0
        %935 = vmatpush.msra.mxu0 0.0
        %936 = vmatpush.msra.mxu0 0.0
        %937 = vmatpush.msra.mxu0 0.0
        %938 = vmatpush.msra.mxu0 %v921
        %939 = vmatpush.msra.mxu0 %v920
        %940 = vmatpush.msra.mxu0 %v919
        %941 = vmatpush.msra.mxu0 %v918
        %942 = vmatpush.msra.mxu0 %v917
        %943 = vmatpush.msra.mxu0 %v916
        %944 = vmatpush.msra.mxu0 %v915
        %945 = vmatpush.msra.mxu0 %v914
        %946 = vmatmul.f32.gmra.mxu0 %v928
        %v947 = vpop.f32.mrf.mxu0
        %v948 = vadd.f32 %v924, %v947
        %949 = vdwg.mxu0
        %v950 = vadd.f32 %v948, %v849
        %951 = vst.msk [vmem:[%s409] sm:$0xff] %vm417, %v950
        %s952 = sand.u32 %s271, 1
        %s953 = scalar_lea.sflag [#allocation5], %s952
        %s954 = sand.u32 %s271, 1
        %s955 = smul.addr %s954, 8
        %s956 = scalar_lea.vmem [#allocation8], %s955
        // Predicated region
        $region73: #{tpu_custom_call.1} parent=63 // pred_check
          %p957 = pneg %p281
        $region74: #{tpu_custom_call.1} parent=63 // pred_check_branch
          %959 = sbr.rel (%p957) target = $region76
        $region75: #{tpu_custom_call.1} parent=63 // pred_region
          %961 = vsyncadd %s953, 0
          %s962 = smul.addr %s27, 8
          %s963 = scalar_lea.hbm %s11, %s962
          %s965 = sshll.u32 %s956, 4
          %s966 = int_to_ptr.vmem [resolvable:$true] %s965
          %s967 = sshll.u32 %s963, 4
          %s968 = int_to_ptr.hbm [resolvable:$true] %s967
          %970 = dma.vmem_to_hbm [thread:$0]  %s966, 128, %s968, %s953
        $region76: #{tpu_custom_call.1} parent=63 // pred_fallthru
          _
      $region64: #{tpu_custom_call.1} parent=5 // pred_fallthru
        _
      %p971 = scmp.le.s32.totalorder 2, %s22
      // Predicated region
      $region77: #{tpu_custom_call.1} parent=5 // pred_check
        %p972 = pneg %p971
      $region78: #{tpu_custom_call.1} parent=5 // pred_check_branch
        %974 = sbr.rel (%p972) target = $region80
      $region79: #{tpu_custom_call.1} parent=5 // pred_region
        %s975 = ssub.s32 %s22, 2
        // Predicated region
        $region81: #{tpu_custom_call.1} parent=79 // pred_check
          %p976 = pneg %p287
        $region82: #{tpu_custom_call.1} parent=79 // pred_check_branch
          %978 = sbr.rel (%p976) target = $region84
        $region83: #{tpu_custom_call.1} parent=79 // pred_region
          %s979 = sand.u32 %s272, 1
          %s980 = scalar_lea.sflag [#allocation5], %s979
          %s981 = sand.u32 %s272, 1
          %s982 = smul.addr %s981, 8
          %s983 = scalar_lea.vmem [#allocation8], %s982
          %985 = dma.done %s980, 128
        $region84: #{tpu_custom_call.1} parent=79 // pred_fallthru
          _
      $region80: #{tpu_custom_call.1} parent=5 // pred_fallthru
        _
    $region6: #{tpu_custom_call.1} parent=1 // loop_footer
      %s26 = sadd.s32 1, %s22
    $region7: #{tpu_custom_call.1} parent=1 // loop_footer_branch
      %21 = sbr.rel target = $region3
    $region8: #{tpu_custom_call.1} parent=1 // loop_exit
      _
    %986 = vsyncpa [#allocation4], 1
    %s987 = scalar_lea.sflag [#allocation4], 1
    %988 = vsyncpa %s987, 1
    %989 = vsyncpa [#allocation7], 1
    %990 = vsyncpa [#allocation5], 1
    %s991 = scalar_lea.sflag [#allocation5], 1
    %992 = vsyncpa %s991, 1

</llo_original>
